<compile_context>
chip_gen: v6e
topology: v6e:2x2x1
jax: 0.10.0
libtpu: 0.0.40
codegen_flags: <defaults>
</compile_context>

<pallas_src>
import functools

import jax
import jax.numpy as jnp
from jax import lax
from jax.experimental import pallas as pl
from jax.experimental.pallas import tpu as pltpu


def _round_up(x, m):
    return (x + m - 1) // m * m


def _vmem_budget_bytes():
    try:
        cap = int(pltpu.get_tpu_info().vmem_capacity_bytes)
    except Exception:
        cap = 64 * 1024 * 1024                       # conservative (v7x physical per-TC)
    # Review: ~0.75 of physical (v7x: 48 of 64 MiB; v5e/v6e: 96 of 128 MiB).
    return int(cap * 0.75)


def _resident_spec(shape, index_map):
    """BlockSpec for grid-invariant operands; single-buffered when supported."""
    try:
        return pl.BlockSpec(shape, index_map, pipeline_mode=pl.Buffered(1))
    except Exception:
        return pl.BlockSpec(shape, index_map)


def _pick_row_tile(m, fixed_bytes, per_row_bytes, budget):
    if fixed_bytes >= budget:
        # TODO(synk): add an output-channel tile axis (weight block (K, tn) +
        # per-channel-tile stats) instead of failing for very large C_out on v7x.
        raise ValueError(
            f"resident operands need {fixed_bytes} B of VMEM > budget {budget} B; "
            "output-channel tiling required")
    tm = (budget - fixed_bytes) // per_row_bytes
    tm = int(max(128, min(2048, tm)))
    tm = (tm // 128) * 128
    return min(tm, _round_up(m, 128))


def _conv_stats_kernel(col_ref, w_ref, y_ref, psum_ref, pssq_ref):
    # Conv contraction for this row tile: bf16 operands, f32 MXU accumulation.
    y = jnp.dot(col_ref[...], w_ref[...], preferred_element_type=jnp.float32)
    y_ref[...] = y
    # Per-tile BN partial statistics, taken from the f32 accumulator while the
    # tile is still in VMEM (free filler under MXU/DMA slack).
    # NOTE: downstream E[y^2]-E[y]^2 is adequate at this scale / tolerance; for
    # large activation means prefer shifted / Welford-style accumulation.
    s = jnp.sum(y, axis=0, keepdims=True)                    # (1, Cp)
    q = jnp.sum(y * y, axis=0, keepdims=True)                # (1, Cp)
    # Sublane-broadcast to (8, Cp) keeps the stats output blocks (8,128)-aligned.
    psum_ref[...] = jnp.broadcast_to(s, psum_ref.shape)
    pssq_ref[...] = jnp.broadcast_to(q, pssq_ref.shape)


def _bn_hswish_kernel(scale_ref, shift_ref, y_ref, o_ref):
    z = y_ref[...] * scale_ref[...] + shift_ref[...]          # f32 BN affine
    o_ref[...] = z * jnp.clip(z + 3.0, 0.0, 6.0) * (1.0 / 6.0)  # Hswish


def conv_set_forward(x, weight, gamma, beta, *, stride, padding, eps=1e-5,
                     nchw_out=True):
    """x: (N, C_in, H, W) f32.  weight: (C_out, C_in, KH, KW).  Returns NCHW
    (or NHWC with nchw_out=False, which skips a full HBM pass when the consumer
    is the next conv_set)."""
    N, C_in, H, W = x.shape
    C_out, _, KH, KW = weight.shape
    OH = (H + 2 * padding - KH) // stride + 1
    OW = (W + 2 * padding - KW) // stride + 1

    # ---- im2col (XLA glue; ordering matches PyTorch weight flattening) ----
    # TODO(synk): fold the KH*KW tap reduction into call 1 (tap grid axis over
    # strided slices of the padded input) so the ~KH*KW x `col` matrix is never
    # materialized in HBM -- biggest remaining lever, especially on v5e/v6e.
    xp = jnp.pad(x, ((0, 0), (0, 0), (padding, padding), (padding, padding)))
    cols = []
    for kh in range(KH):
        for kw in range(KW):
            cols.append(xp[:, :, kh:kh + stride * OH:stride, kw:kw + stride * OW:stride])
    col = jnp.stack(cols, axis=2)                              # (N, C_in, KH*KW, OH, OW)
    col = col.transpose(0, 3, 4, 1, 2).reshape(N * OH * OW, C_in * KH * KW)

    M, K = col.shape
    # Lane-dense output channels (unmasked vst, full MXU result columns); K is
    # left unpadded in HBM (full-extent block).
    Cp = _round_up(C_out, 256) if C_out > 128 else 128

    budget = _vmem_budget_bytes()
    # Resident footprint (single-buffered) + small slack; per-row cost for the
    # heavier of the two calls (double-buffered streaming tiles).
    fixed1 = K * Cp * 2 + 2 * (2 * 8 * Cp * 4) + (2 << 20)     # bf16 weight + stat outs
    fixed2 = 2 * Cp * 4 + (2 << 20)                            # scale + shift
    per_row1 = 2 * (K * 2) + 2 * (Cp * 4)                      # col bf16 in + y f32 out
    per_row2 = 2 * (Cp * 4) + 2 * (Cp * 4)                     # y in + out
    tm = _pick_row_tile(M, max(fixed1, fixed2), max(per_row1, per_row2), budget)
    M_pad = _round_up(M, tm)
    nt = M_pad // tm

    # Zero rows/channels contribute nothing to the conv or the statistics.
    col_b = jnp.pad(col.astype(jnp.bfloat16), ((0, M_pad - M), (0, 0)))
    w_b = jnp.pad(weight.reshape(C_out, K).T.astype(jnp.bfloat16),
                  ((0, 0), (0, Cp - C_out)))

    # ---- call 1: conv (bf16 MXU, f32 accum) + per-tile BN partial stats ----
    y, psum, pssq = pl.pallas_call(
        _conv_stats_kernel,
        out_shape=(jax.ShapeDtypeStruct((M_pad, Cp), jnp.float32),
                   jax.ShapeDtypeStruct((8 * nt, Cp), jnp.float32),
                   jax.ShapeDtypeStruct((8 * nt, Cp), jnp.float32)),
        grid_spec=pltpu.PrefetchScalarGridSpec(
            num_scalar_prefetch=0,
            grid=(nt,),
            in_specs=[
                pl.BlockSpec((tm, K), lambda i: (i, 0)),       # patch rows (bf16)
                _resident_spec((K, Cp), lambda i: (0, 0)),     # weights (resident)
            ],
            out_specs=[
                pl.BlockSpec((tm, Cp), lambda i: (i, 0)),      # pre-BN conv output
                pl.BlockSpec((8, Cp), lambda i: (i, 0)),       # per-tile sum(y)
                pl.BlockSpec((8, Cp), lambda i: (i, 0)),       # per-tile sum(y*y)
            ],
        ),
        compiler_params=pltpu.CompilerParams(
            dimension_semantics=("parallel",),                 # row tiles independent
            vmem_limit_bytes=int(budget),
        ),
    )(col_b, w_b)

    # ---- fold BN batch statistics into scale/shift (tiny O(C) XLA op) ----
    sum_y = psum.reshape(nt, 8, Cp)[:, 0, :].sum(axis=0)
    ssq_y = pssq.reshape(nt, 8, Cp)[:, 0, :].sum(axis=0)
    mean = sum_y / M
    var = ssq_y / M - mean * mean                              # padded channels: exactly 0
    gamma_p = jnp.pad(gamma.astype(jnp.float32), (0, Cp - C_out))
    beta_p = jnp.pad(beta.astype(jnp.float32), (0, Cp - C_out))
    scale_v = gamma_p * lax.rsqrt(var + eps)                   # padded: gamma=0 -> 0
    shift_v = beta_p - mean * scale_v
    scale = scale_v.reshape(1, Cp)
    shift = shift_v.reshape(1, Cp)

    # ---- call 2: BN affine + Hswish, in place on y (input_output_aliases) ----
    out_flat = pl.pallas_call(
        _bn_hswish_kernel,
        out_shape=jax.ShapeDtypeStruct((M_pad, Cp), jnp.float32),
        grid_spec=pltpu.PrefetchScalarGridSpec(
            num_scalar_prefetch=0,
            grid=(nt,),
            in_specs=[
                _resident_spec((1, Cp), lambda i: (0, 0)),     # scale (resident)
                _resident_spec((1, Cp), lambda i: (0, 0)),     # shift (resident)
                pl.BlockSpec((tm, Cp), lambda i: (i, 0)),      # pre-BN y
            ],
            out_specs=pl.BlockSpec((tm, Cp), lambda i: (i, 0)),
        ),
        input_output_aliases={2: 0},                           # overwrite y in place
        compiler_params=pltpu.CompilerParams(
            dimension_semantics=("parallel",),
            vmem_limit_bytes=int(budget),
        ),
    )(scale, shift, y)

    out = out_flat[:M, :C_out].reshape(N, OH, OW, C_out)
    # TODO(synk): emit bf16 / keep NHWC end-to-end when the consumer is another
    # conv_set; NCHW f32 kept here to match the PyTorch module contract.
    if nchw_out:
        out = out.transpose(0, 3, 1, 2)
    return out


def _reference(x, weight, gamma, beta, *, stride, padding, eps=1e-5,
               mxu_dtype=jnp.float32):
    conv = lax.conv_general_dilated(
        x.astype(mxu_dtype), weight.astype(mxu_dtype), (stride, stride),
        [(padding, padding)] * 2, dimension_numbers=("NCHW", "OIHW", "NCHW"),
        preferred_element_type=jnp.float32)
    m = conv.mean(axis=(0, 2, 3), keepdims=True)
    v = conv.var(axis=(0, 2, 3), keepdims=True)                # biased, like BN training
    bn = (conv - m) / jnp.sqrt(v + eps) * gamma[None, :, None, None] \
        + beta[None, :, None, None]
    return bn * jnp.clip(bn + 3.0, 0.0, 6.0) / 6.0


if __name__ == "__main__":
    # conv_set(in_ch=4, out_ch=8, kernel_size=3, stride=1, padding=1)
    N, C_in, H, W = 2, 4, 16, 16
    C_out, KS, STRIDE, PAD = 8, 3, 1, 1

    key = jax.random.PRNGKey(0)
    kx, kw = jax.random.split(key)
    x = jax.random.normal(kx, (N, C_in, H, W), dtype=jnp.float32)
    weight = jax.random.normal(kw, (C_out, C_in, KS, KS), dtype=jnp.float32) * 0.1
    gamma = jnp.ones((C_out,), dtype=jnp.float32)              # BatchNorm2d default init
    beta = jnp.zeros((C_out,), dtype=jnp.float32)

    fwd = jax.jit(functools.partial(conv_set_forward, stride=STRIDE, padding=PAD))
    out = jax.block_until_ready(fwd(x, weight, gamma, beta))
    assert out.shape == (N, C_out, H, W), out.shape

    # Tight check vs. a reference fed the same bf16-rounded MXU operands.
    ref_bf16 = _reference(x, weight, gamma, beta, stride=STRIDE, padding=PAD,
                          mxu_dtype=jnp.bfloat16)
    assert jnp.allclose(out, ref_bf16, atol=1e-3, rtol=1e-3), \
        float(jnp.max(jnp.abs(out - ref_bf16)))
    # Sanity check vs. the full-f32 PyTorch-equivalent reference (bf16 MXU inputs).
    ref_f32 = _reference(x, weight, gamma, beta, stride=STRIDE, padding=PAD)
    assert jnp.allclose(out, ref_f32, atol=5e-2, rtol=5e-2), \
        float(jnp.max(jnp.abs(out - ref_f32)))

    print("KERNEL_OK")
</pallas_src>

<mosaic_0001>
module attributes {stable_mosaic.version = 11 : i64} {
  func.func @_conv_stats_kernel(%arg0: i32, %arg1: memref<512x36xbf16, #tpu.memory_space<vmem>>, %arg2: memref<36x128xbf16, #tpu.memory_space<vmem>>, %arg3: memref<512x128xf32, #tpu.memory_space<vmem>>, %arg4: memref<8x128xf32, #tpu.memory_space<vmem>>, %arg5: memref<8x128xf32, #tpu.memory_space<vmem>>) attributes {dimension_semantics = [#tpu.dimension_semantics<parallel>], iteration_bounds = array<i64: 1>, scalar_prefetch = 0 : i64, scratch_operands = 0 : i64, tpu.core_type = #tpu.core_type<tc>, window_params = [{transform_indices = @transform_0, window_bounds = array<i64: 512, 36>}, {pipeline_mode = #tpu.pipeline_mode<synchronous>, transform_indices = @transform_1, window_bounds = array<i64: 36, 128>}, {transform_indices = @transform_2, window_bounds = array<i64: 512, 128>}, {transform_indices = @transform_3, window_bounds = array<i64: 8, 128>}, {transform_indices = @transform_4, window_bounds = array<i64: 8, 128>}]} {
    %c0 = arith.constant 0 : index
    %c0_0 = arith.constant 0 : index
    %0 = vector.load %arg1[%c0, %c0_0] : memref<512x36xbf16, #tpu.memory_space<vmem>>, vector<512x36xbf16>
    %c0_1 = arith.constant 0 : index
    %c0_2 = arith.constant 0 : index
    %1 = vector.load %arg2[%c0_1, %c0_2] : memref<36x128xbf16, #tpu.memory_space<vmem>>, vector<36x128xbf16>
    %cst = arith.constant dense<0.000000e+00> : vector<512x128xf32>
    %2 = tpu.matmul %0, %1, %cst {dimension_numbers = #tpu.dot_dimension_numbers<[1], [0], [0], [1], [0, 0, 1, 1], [], []>} : vector<512x36xbf16>, vector<36x128xbf16>, vector<512x128xf32> -> vector<512x128xf32>
    %c0_3 = arith.constant 0 : index
    %c0_4 = arith.constant 0 : index
    %3 = vector.load %arg3[%c0_3, %c0_4] : memref<512x128xf32, #tpu.memory_space<vmem>>, vector<512x128xf32>
    tpu.vector_store %arg3[%c0_3, %c0_4], %2 {strides = array<i32>} : memref<512x128xf32, #tpu.memory_space<vmem>>, vector<512x128xf32>,
    %cst_5 = arith.constant dense<0.000000e+00> : vector<128xf32>
    %4 = vector.multi_reduction <add>, %2, %cst_5 [0] : vector<512x128xf32> to vector<128xf32>
    %5 = vector.shape_cast %4 : vector<128xf32> to vector<1x128xf32>
    %6 = arith.mulf %2, %2 : vector<512x128xf32>
    %cst_6 = arith.constant dense<0.000000e+00> : vector<128xf32>
    %7 = vector.multi_reduction <add>, %6, %cst_6 [0] : vector<512x128xf32> to vector<128xf32>
    %8 = vector.shape_cast %7 : vector<128xf32> to vector<1x128xf32>
    %9 = vector.shape_cast %5 : vector<1x128xf32> to vector<1x128xf32>
    %10 = vector.broadcast %9 : vector<1x128xf32> to vector<8x128xf32>
    %c0_7 = arith.constant 0 : index
    %c0_8 = arith.constant 0 : index
    %11 = vector.load %arg4[%c0_7, %c0_8] : memref<8x128xf32, #tpu.memory_space<vmem>>, vector<8x128xf32>
    tpu.vector_store %arg4[%c0_7, %c0_8], %10 {strides = array<i32>} : memref<8x128xf32, #tpu.memory_space<vmem>>, vector<8x128xf32>,
    %12 = vector.shape_cast %8 : vector<1x128xf32> to vector<1x128xf32>
    %13 = vector.broadcast %12 : vector<1x128xf32> to vector<8x128xf32>
    %c0_9 = arith.constant 0 : index
    %c0_10 = arith.constant 0 : index
    %14 = vector.load %arg5[%c0_9, %c0_10] : memref<8x128xf32, #tpu.memory_space<vmem>>, vector<8x128xf32>
    tpu.vector_store %arg5[%c0_9, %c0_10], %13 {strides = array<i32>} : memref<8x128xf32, #tpu.memory_space<vmem>>, vector<8x128xf32>,
    return
  }
  func.func @transform_0(%arg0: i32) -> (i32, i32) {
    %c0_i32 = arith.constant 0 : i32
    %c0_i32_0 = arith.constant 0 : i32
    return %arg0, %c0_i32 : i32, i32
  }
  func.func @transform_1(%arg0: i32) -> (i32, i32) {
    %c0_i32 = arith.constant 0 : i32
    %c0_i32_0 = arith.constant 0 : i32
    %c0_i32_1 = arith.constant 0 : i32
    return %c0_i32, %c0_i32_0 : i32, i32
  }
  func.func @transform_2(%arg0: i32) -> (i32, i32) {
    %c0_i32 = arith.constant 0 : i32
    %c0_i32_0 = arith.constant 0 : i32
    return %arg0, %c0_i32 : i32, i32
  }
  func.func @transform_3(%arg0: i32) -> (i32, i32) {
    %c0_i32 = arith.constant 0 : i32
    %c0_i32_0 = arith.constant 0 : i32
    return %arg0, %c0_i32 : i32, i32
  }
  func.func @transform_4(%arg0: i32) -> (i32, i32) {
    %c0_i32 = arith.constant 0 : i32
    %c0_i32_0 = arith.constant 0 : i32
    return %arg0, %c0_i32 : i32, i32
  }
}

module attributes {stable_mosaic.version = 11 : i64} {
  func.func @_bn_hswish_kernel(%arg0: i32, %arg1: memref<1x128xf32, #tpu.memory_space<vmem>>, %arg2: memref<1x128xf32, #tpu.memory_space<vmem>>, %arg3: memref<512x128xf32, #tpu.memory_space<vmem>>, %arg4: memref<512x128xf32, #tpu.memory_space<vmem>>) attributes {dimension_semantics = [#tpu.dimension_semantics<parallel>], iteration_bounds = array<i64: 1>, scalar_prefetch = 0 : i64, scratch_operands = 0 : i64, tpu.core_type = #tpu.core_type<tc>, window_params = [{pipeline_mode = #tpu.pipeline_mode<synchronous>, transform_indices = @transform_0, window_bounds = array<i64: 1, 128>}, {pipeline_mode = #tpu.pipeline_mode<synchronous>, transform_indices = @transform_1, window_bounds = array<i64: 1, 128>}, {transform_indices = @transform_2, window_bounds = array<i64: 512, 128>}, {transform_indices = @transform_3, window_bounds = array<i64: 512, 128>}]} {
    %c0 = arith.constant 0 : index
    %c0_0 = arith.constant 0 : index
    %0 = vector.load %arg3[%c0, %c0_0] : memref<512x128xf32, #tpu.memory_space<vmem>>, vector<512x128xf32>
    %c0_1 = arith.constant 0 : index
    %c0_2 = arith.constant 0 : index
    %1 = vector.load %arg1[%c0_1, %c0_2] : memref<1x128xf32, #tpu.memory_space<vmem>>, vector<1x128xf32>
    %2 = vector.broadcast %1 : vector<1x128xf32> to vector<512x128xf32>
    %3 = arith.mulf %0, %2 : vector<512x128xf32>
    %c0_3 = arith.constant 0 : index
    %c0_4 = arith.constant 0 : index
    %4 = vector.load %arg2[%c0_3, %c0_4] : memref<1x128xf32, #tpu.memory_space<vmem>>, vector<1x128xf32>
    %5 = vector.broadcast %4 : vector<1x128xf32> to vector<512x128xf32>
    %6 = arith.addf %3, %5 : vector<512x128xf32>
    %cst = arith.constant 3.000000e+00 : f32
    %7 = vector.broadcast %cst : f32 to vector<512x128xf32>
    %8 = arith.addf %6, %7 : vector<512x128xf32>
    %cst_5 = arith.constant 0.000000e+00 : f32
    %cst_6 = arith.constant 6.000000e+00 : f32
    %9 = vector.broadcast %cst_5 : f32 to vector<512x128xf32>
    %10 = arith.maximumf %9, %8 : vector<512x128xf32>
    %11 = vector.broadcast %cst_6 : f32 to vector<512x128xf32>
    %12 = arith.minimumf %11, %10 : vector<512x128xf32>
    %13 = arith.mulf %6, %12 : vector<512x128xf32>
    %cst_7 = arith.constant 0.166666672 : f32
    %14 = vector.broadcast %cst_7 : f32 to vector<512x128xf32>
    %15 = arith.mulf %13, %14 : vector<512x128xf32>
    %c0_8 = arith.constant 0 : index
    %c0_9 = arith.constant 0 : index
    %16 = vector.load %arg4[%c0_8, %c0_9] : memref<512x128xf32, #tpu.memory_space<vmem>>, vector<512x128xf32>
    tpu.vector_store %arg4[%c0_8, %c0_9], %15 {strides = array<i32>} : memref<512x128xf32, #tpu.memory_space<vmem>>, vector<512x128xf32>,
    return
  }
  func.func @transform_0(%arg0: i32) -> (i32, i32) {
    %c0_i32 = arith.constant 0 : i32
    %c0_i32_0 = arith.constant 0 : i32
    %c0_i32_1 = arith.constant 0 : i32
    return %c0_i32, %c0_i32_0 : i32, i32
  }
  func.func @transform_1(%arg0: i32) -> (i32, i32) {
    %c0_i32 = arith.constant 0 : i32
    %c0_i32_0 = arith.constant 0 : i32
    %c0_i32_1 = arith.constant 0 : i32
    return %c0_i32, %c0_i32_0 : i32, i32
  }
  func.func @transform_2(%arg0: i32) -> (i32, i32) {
    %c0_i32 = arith.constant 0 : i32
    %c0_i32_0 = arith.constant 0 : i32
    return %arg0, %c0_i32 : i32, i32
  }
  func.func @transform_3(%arg0: i32) -> (i32, i32) {
    %c0_i32 = arith.constant 0 : i32
    %c0_i32_0 = arith.constant 0 : i32
    return %arg0, %c0_i32 : i32, i32
  }
}

</mosaic_0001>

<llo_original>
// kernel: conv_set_forward.3
$region0: #{conv_set_forward.3}
  #allocation0 [shape = 'u32[]', space=smem, size = 0x4, offset = 0x4, fixed_abs, tag = 'smem constant byte address 0x4 - core index']
  #allocation1 [shape = 'u32[144,128]{1,0:T(1,128)}', space=vmem, size = 0x12000, scoped, tag = 'internal scratch']
  %s0 = inlined_call_operand.vmem [shape: f32[1,128], index: 0, kind: input, shape index: {}]
  %s1 = inlined_call_operand.vmem [shape: f32[1,128], index: 1, kind: input, shape index: {}]
  %s2 = inlined_call_operand.vmem [shape: f32[512,128], index: 2, kind: input, shape index: {}, may-alias: {2,3}]
  %s3 = inlined_call_operand.vmem [shape: f32[512,128], index: 3, kind: output, shape index: {}, may-alias: {2,3}]
  %s4 = sld [smem:[#allocation0]]
  $region22: #{conv_set_forward.3} parent=0
    _
  %s6 = ssub.s32 1, %s4
  %s7 = scalar_select 0, %s6, %s4
  // Predicated region
  $region2: #{conv_set_forward.3} parent=0 // pred_check
    _
  $region3: #{conv_set_forward.3} parent=0 // pred_check_branch
    %9 = sbr.rel (0) target = $region5
  $region4: #{conv_set_forward.3} parent=0 // pred_region
    _
  $region5: #{conv_set_forward.3} parent=0 // pred_fallthru
    _
  // Predicated region
  $region6: #{conv_set_forward.3} parent=0 // pred_check
    _
  $region7: #{conv_set_forward.3} parent=0 // pred_check_branch
    %11 = sbr.rel (0) target = $region9
  $region8: #{conv_set_forward.3} parent=0 // pred_region
    _
  $region9: #{conv_set_forward.3} parent=0 // pred_fallthru
    _
  // Predicated region
  $region10: #{conv_set_forward.3} parent=0 // pred_check
    _
  $region11: #{conv_set_forward.3} parent=0 // pred_check_branch
    %13 = sbr.rel (0) target = $region13
  $region12: #{conv_set_forward.3} parent=0 // pred_region
    _
  $region13: #{conv_set_forward.3} parent=0 // pred_fallthru
    _
  %v14 = vld [vmem:[%s2] sm:$0xff]
  %v15 = vld [vmem:[%s2 + $0x8] sm:$0xff]
  %v16 = vld [vmem:[%s2 + $0x10] sm:$0xff]
  %v17 = vld [vmem:[%s2 + $0x18] sm:$0xff]
  %v18 = vld [vmem:[%s2 + $0x20] sm:$0xff]
  %v19 = vld [vmem:[%s2 + $0x28] sm:$0xff]
  %v20 = vld [vmem:[%s2 + $0x30] sm:$0xff]
  %v21 = vld [vmem:[%s2 + $0x38] sm:$0xff]
  %v22 = vld [vmem:[%s2 + $0x40] sm:$0xff]
  %v23 = vld [vmem:[%s2 + $0x48] sm:$0xff]
  %v24 = vld [vmem:[%s2 + $0x50] sm:$0xff]
  %v25 = vld [vmem:[%s2 + $0x58] sm:$0xff]
  %v26 = vld [vmem:[%s2 + $0x60] sm:$0xff]
  %v27 = vld [vmem:[%s2 + $0x68] sm:$0xff]
  %v28 = vld [vmem:[%s2 + $0x70] sm:$0xff]
  %v29 = vld [vmem:[%s2 + $0x78] sm:$0xff]
  %v30 = vld [vmem:[%s2 + $0x80] sm:$0xff]
  %v31 = vld [vmem:[%s2 + $0x88] sm:$0xff]
  %v32 = vld [vmem:[%s2 + $0x90] sm:$0xff]
  %v33 = vld [vmem:[%s2 + $0x98] sm:$0xff]
  %v34 = vld [vmem:[%s2 + $0xa0] sm:$0xff]
  %v35 = vld [vmem:[%s2 + $0xa8] sm:$0xff]
  %v36 = vld [vmem:[%s2 + $0xb0] sm:$0xff]
  %v37 = vld [vmem:[%s2 + $0xb8] sm:$0xff]
  %v38 = vld [vmem:[%s2 + $0xc0] sm:$0xff]
  %v39 = vld [vmem:[%s2 + $0xc8] sm:$0xff]
  %v40 = vld [vmem:[%s2 + $0xd0] sm:$0xff]
  %v41 = vld [vmem:[%s2 + $0xd8] sm:$0xff]
  %v42 = vld [vmem:[%s2 + $0xe0] sm:$0xff]
  %v43 = vld [vmem:[%s2 + $0xe8] sm:$0xff]
  %v44 = vld [vmem:[%s2 + $0xf0] sm:$0xff]
  %v45 = vld [vmem:[%s2 + $0xf8] sm:$0xff]
  %v46 = vld [vmem:[%s2 + $0x100] sm:$0xff]
  %v47 = vld [vmem:[%s2 + $0x108] sm:$0xff]
  %v48 = vld [vmem:[%s2 + $0x110] sm:$0xff]
  %v49 = vld [vmem:[%s2 + $0x118] sm:$0xff]
  %v50 = vld [vmem:[%s2 + $0x120] sm:$0xff]
  %v51 = vld [vmem:[%s2 + $0x128] sm:$0xff]
  %v52 = vld [vmem:[%s2 + $0x130] sm:$0xff]
  %v53 = vld [vmem:[%s2 + $0x138] sm:$0xff]
  %v54 = vld [vmem:[%s2 + $0x140] sm:$0xff]
  %v55 = vld [vmem:[%s2 + $0x148] sm:$0xff]
  %v56 = vld [vmem:[%s2 + $0x150] sm:$0xff]
  %v57 = vld [vmem:[%s2 + $0x158] sm:$0xff]
  %v58 = vld [vmem:[%s2 + $0x160] sm:$0xff]
  %v59 = vld [vmem:[%s2 + $0x168] sm:$0xff]
  %v60 = vld [vmem:[%s2 + $0x170] sm:$0xff]
  %v61 = vld [vmem:[%s2 + $0x178] sm:$0xff]
  %v62 = vld [vmem:[%s2 + $0x180] sm:$0xff]
  %v63 = vld [vmem:[%s2 + $0x188] sm:$0xff]
  %v64 = vld [vmem:[%s2 + $0x190] sm:$0xff]
  %v65 = vld [vmem:[%s2 + $0x198] sm:$0xff]
  %v66 = vld [vmem:[%s2 + $0x1a0] sm:$0xff]
  %v67 = vld [vmem:[%s2 + $0x1a8] sm:$0xff]
  %v68 = vld [vmem:[%s2 + $0x1b0] sm:$0xff]
  %v69 = vld [vmem:[%s2 + $0x1b8] sm:$0xff]
  %v70 = vld [vmem:[%s2 + $0x1c0] sm:$0xff]
  %v71 = vld [vmem:[%s2 + $0x1c8] sm:$0xff]
  %v72 = vld [vmem:[%s2 + $0x1d0] sm:$0xff]
  %v73 = vld [vmem:[%s2 + $0x1d8] sm:$0xff]
  %v74 = vld [vmem:[%s2 + $0x1e0] sm:$0xff]
  %v75 = vld [vmem:[%s2 + $0x1e8] sm:$0xff]
  %v76 = vld [vmem:[%s2 + $0x1f0] sm:$0xff]
  %v77 = vld [vmem:[%s2 + $0x1f8] sm:$0xff]
  %v78 = vld [vmem:[%s0] sm:$0x1]
  %v80 = vlaneseq
  %v81 = vshrl.u32 %v80, 7
  %v82 = vsub.s32 0, %v81
  %v83 = vrot.slane %v78, %v82
  %v85 = vmul.f32 %v14, %v83
  %v86 = vmul.f32 %v15, %v83
  %v87 = vmul.f32 %v16, %v83
  %v88 = vmul.f32 %v17, %v83
  %v89 = vmul.f32 %v18, %v83
  %v90 = vmul.f32 %v19, %v83
  %v91 = vmul.f32 %v20, %v83
  %v92 = vmul.f32 %v21, %v83
  %v93 = vmul.f32 %v22, %v83
  %v94 = vmul.f32 %v23, %v83
  %v95 = vmul.f32 %v24, %v83
  %v96 = vmul.f32 %v25, %v83
  %v97 = vmul.f32 %v26, %v83
  %v98 = vmul.f32 %v27, %v83
  %v99 = vmul.f32 %v28, %v83
  %v100 = vmul.f32 %v29, %v83
  %v101 = vmul.f32 %v30, %v83
  %v102 = vmul.f32 %v31, %v83
  %v103 = vmul.f32 %v32, %v83
  %v104 = vmul.f32 %v33, %v83
  %v105 = vmul.f32 %v34, %v83
  %v106 = vmul.f32 %v35, %v83
  %v107 = vmul.f32 %v36, %v83
  %v108 = vmul.f32 %v37, %v83
  %v109 = vmul.f32 %v38, %v83
  %v110 = vmul.f32 %v39, %v83
  %v111 = vmul.f32 %v40, %v83
  %v112 = vmul.f32 %v41, %v83
  %v113 = vmul.f32 %v42, %v83
  %v114 = vmul.f32 %v43, %v83
  %v115 = vmul.f32 %v44, %v83
  %v116 = vmul.f32 %v45, %v83
  %v117 = vmul.f32 %v46, %v83
  %v118 = vmul.f32 %v47, %v83
  %v119 = vmul.f32 %v48, %v83
  %v120 = vmul.f32 %v49, %v83
  %v121 = vmul.f32 %v50, %v83
  %v122 = vmul.f32 %v51, %v83
  %v123 = vmul.f32 %v52, %v83
  %v124 = vmul.f32 %v53, %v83
  %v125 = vmul.f32 %v54, %v83
  %v126 = vmul.f32 %v55, %v83
  %v127 = vmul.f32 %v56, %v83
  %v128 = vmul.f32 %v57, %v83
  %v129 = vmul.f32 %v58, %v83
  %v130 = vmul.f32 %v59, %v83
  %v131 = vmul.f32 %v60, %v83
  %v132 = vmul.f32 %v61, %v83
  %v133 = vmul.f32 %v62, %v83
  %v134 = vmul.f32 %v63, %v83
  %v135 = vmul.f32 %v64, %v83
  %v136 = vmul.f32 %v65, %v83
  %v137 = vmul.f32 %v66, %v83
  %v138 = vmul.f32 %v67, %v83
  %v139 = vmul.f32 %v68, %v83
  %v140 = vmul.f32 %v69, %v83
  %v141 = vmul.f32 %v70, %v83
  %v142 = vmul.f32 %v71, %v83
  %v143 = vmul.f32 %v72, %v83
  %v144 = vmul.f32 %v73, %v83
  %v145 = vmul.f32 %v74, %v83
  %v146 = vmul.f32 %v75, %v83
  %v147 = vmul.f32 %v76, %v83
  %v148 = vmul.f32 %v77, %v83
  %v149 = vld [vmem:[%s1] sm:$0x1]
  %v151 = vlaneseq
  %v152 = vshrl.u32 %v151, 7
  %v153 = vsub.s32 0, %v152
  %v154 = vrot.slane %v149, %v153
  %v156 = vadd.f32 %v85, %v154
  %v157 = vadd.f32 %v86, %v154
  %v158 = vadd.f32 %v87, %v154
  %v159 = vadd.f32 %v88, %v154
  %v160 = vadd.f32 %v89, %v154
  %v161 = vadd.f32 %v90, %v154
  %v162 = vadd.f32 %v91, %v154
  %v163 = vadd.f32 %v92, %v154
  %v164 = vadd.f32 %v93, %v154
  %v165 = vadd.f32 %v94, %v154
  %v166 = vadd.f32 %v95, %v154
  %v167 = vadd.f32 %v96, %v154
  %v168 = vadd.f32 %v97, %v154
  %v169 = vadd.f32 %v98, %v154
  %v170 = vadd.f32 %v99, %v154
  %v171 = vadd.f32 %v100, %v154
  %v172 = vadd.f32 %v101, %v154
  %v173 = vadd.f32 %v102, %v154
  %v174 = vadd.f32 %v103, %v154
  %v175 = vadd.f32 %v104, %v154
  %v176 = vadd.f32 %v105, %v154
  %v177 = vadd.f32 %v106, %v154
  %v178 = vadd.f32 %v107, %v154
  %v179 = vadd.f32 %v108, %v154
  %v180 = vadd.f32 %v109, %v154
  %v181 = vadd.f32 %v110, %v154
  %v182 = vadd.f32 %v111, %v154
  %v183 = vadd.f32 %v112, %v154
  %v184 = vadd.f32 %v113, %v154
  %v185 = vadd.f32 %v114, %v154
  %v186 = vadd.f32 %v115, %v154
  %v187 = vadd.f32 %v116, %v154
  %v188 = vadd.f32 %v117, %v154
  %v189 = vadd.f32 %v118, %v154
  %v190 = vadd.f32 %v119, %v154
  %v191 = vadd.f32 %v120, %v154
  %v192 = vadd.f32 %v121, %v154
  %v193 = vadd.f32 %v122, %v154
  %v194 = vadd.f32 %v123, %v154
  %v195 = vadd.f32 %v124, %v154
  %v196 = vadd.f32 %v125, %v154
  %v197 = vadd.f32 %v126, %v154
  %v198 = vadd.f32 %v127, %v154
  %v199 = vadd.f32 %v128, %v154
  %v200 = vadd.f32 %v129, %v154
  %v201 = vadd.f32 %v130, %v154
  %v202 = vadd.f32 %v131, %v154
  %v203 = vadd.f32 %v132, %v154
  %v204 = vadd.f32 %v133, %v154
  %v205 = vadd.f32 %v134, %v154
  %v206 = vadd.f32 %v135, %v154
  %v207 = vadd.f32 %v136, %v154
  %v208 = vadd.f32 %v137, %v154
  %v209 = vadd.f32 %v138, %v154
  %v210 = vadd.f32 %v139, %v154
  %v211 = vadd.f32 %v140, %v154
  %v212 = vadd.f32 %v141, %v154
  %v213 = vadd.f32 %v142, %v154
  %v214 = vadd.f32 %v143, %v154
  %v215 = vadd.f32 %v144, %v154
  %v216 = vadd.f32 %v145, %v154
  %v217 = vadd.f32 %v146, %v154
  %v218 = vadd.f32 %v147, %v154
  %v219 = vadd.f32 %v148, %v154
  %v220 = vadd.f32 %v156, 3.0
  %v221 = vadd.f32 %v157, 3.0
  %v222 = vadd.f32 %v158, 3.0
  %v223 = vadd.f32 %v159, 3.0
  %v224 = vadd.f32 %v160, 3.0
  %v225 = vadd.f32 %v161, 3.0
  %v226 = vadd.f32 %v162, 3.0
  %v227 = vadd.f32 %v163, 3.0
  %v228 = vadd.f32 %v164, 3.0
  %v229 = vadd.f32 %v165, 3.0
  %v230 = vadd.f32 %v166, 3.0
  %v231 = vadd.f32 %v167, 3.0
  %v232 = vadd.f32 %v168, 3.0
  %v233 = vadd.f32 %v169, 3.0
  %v234 = vadd.f32 %v170, 3.0
  %v235 = vadd.f32 %v171, 3.0
  %v236 = vadd.f32 %v172, 3.0
  %v237 = vadd.f32 %v173, 3.0
  %v238 = vadd.f32 %v174, 3.0
  %v239 = vadd.f32 %v175, 3.0
  %v240 = vadd.f32 %v176, 3.0
  %v241 = vadd.f32 %v177, 3.0
  %v242 = vadd.f32 %v178, 3.0
  %v243 = vadd.f32 %v179, 3.0
  %v244 = vadd.f32 %v180, 3.0
  %v245 = vadd.f32 %v181, 3.0
  %v246 = vadd.f32 %v182, 3.0
  %v247 = vadd.f32 %v183, 3.0
  %v248 = vadd.f32 %v184, 3.0
  %v249 = vadd.f32 %v185, 3.0
  %v250 = vadd.f32 %v186, 3.0
  %v251 = vadd.f32 %v187, 3.0
  %v252 = vadd.f32 %v188, 3.0
  %v253 = vadd.f32 %v189, 3.0
  %v254 = vadd.f32 %v190, 3.0
  %v255 = vadd.f32 %v191, 3.0
  %v256 = vadd.f32 %v192, 3.0
  %v257 = vadd.f32 %v193, 3.0
  %v258 = vadd.f32 %v194, 3.0
  %v259 = vadd.f32 %v195, 3.0
  %v260 = vadd.f32 %v196, 3.0
  %v261 = vadd.f32 %v197, 3.0
  %v262 = vadd.f32 %v198, 3.0
  %v263 = vadd.f32 %v199, 3.0
  %v264 = vadd.f32 %v200, 3.0
  %v265 = vadd.f32 %v201, 3.0
  %v266 = vadd.f32 %v202, 3.0
  %v267 = vadd.f32 %v203, 3.0
  %v268 = vadd.f32 %v204, 3.0
  %v269 = vadd.f32 %v205, 3.0
  %v270 = vadd.f32 %v206, 3.0
  %v271 = vadd.f32 %v207, 3.0
  %v272 = vadd.f32 %v208, 3.0
  %v273 = vadd.f32 %v209, 3.0
  %v274 = vadd.f32 %v210, 3.0
  %v275 = vadd.f32 %v211, 3.0
  %v276 = vadd.f32 %v212, 3.0
  %v277 = vadd.f32 %v213, 3.0
  %v278 = vadd.f32 %v214, 3.0
  %v279 = vadd.f32 %v215, 3.0
  %v280 = vadd.f32 %v216, 3.0
  %v281 = vadd.f32 %v217, 3.0
  %v282 = vadd.f32 %v218, 3.0
  %v283 = vadd.f32 %v219, 3.0
  %v284 = vmax.f32 %v220, 0.0
  %v285 = vmax.f32 %v221, 0.0
  %v286 = vmax.f32 %v222, 0.0
  %v287 = vmax.f32 %v223, 0.0
  %v288 = vmax.f32 %v224, 0.0
  %v289 = vmax.f32 %v225, 0.0
  %v290 = vmax.f32 %v226, 0.0
  %v291 = vmax.f32 %v227, 0.0
  %v292 = vmax.f32 %v228, 0.0
  %v293 = vmax.f32 %v229, 0.0
  %v294 = vmax.f32 %v230, 0.0
  %v295 = vmax.f32 %v231, 0.0
  %v296 = vmax.f32 %v232, 0.0
  %v297 = vmax.f32 %v233, 0.0
  %v298 = vmax.f32 %v234, 0.0
  %v299 = vmax.f32 %v235, 0.0
  %v300 = vmax.f32 %v236, 0.0
  %v301 = vmax.f32 %v237, 0.0
  %v302 = vmax.f32 %v238, 0.0
  %v303 = vmax.f32 %v239, 0.0
  %v304 = vmax.f32 %v240, 0.0
  %v305 = vmax.f32 %v241, 0.0
  %v306 = vmax.f32 %v242, 0.0
  %v307 = vmax.f32 %v243, 0.0
  %v308 = vmax.f32 %v244, 0.0
  %v309 = vmax.f32 %v245, 0.0
  %v310 = vmax.f32 %v246, 0.0
  %v311 = vmax.f32 %v247, 0.0
  %v312 = vmax.f32 %v248, 0.0
  %v313 = vmax.f32 %v249, 0.0
  %v314 = vmax.f32 %v250, 0.0
  %v315 = vmax.f32 %v251, 0.0
  %v316 = vmax.f32 %v252, 0.0
  %v317 = vmax.f32 %v253, 0.0
  %v318 = vmax.f32 %v254, 0.0
  %v319 = vmax.f32 %v255, 0.0
  %v320 = vmax.f32 %v256, 0.0
  %v321 = vmax.f32 %v257, 0.0
  %v322 = vmax.f32 %v258, 0.0
  %v323 = vmax.f32 %v259, 0.0
  %v324 = vmax.f32 %v260, 0.0
  %v325 = vmax.f32 %v261, 0.0
  %v326 = vmax.f32 %v262, 0.0
  %v327 = vmax.f32 %v263, 0.0
  %v328 = vmax.f32 %v264, 0.0
  %v329 = vmax.f32 %v265, 0.0
  %v330 = vmax.f32 %v266, 0.0
  %v331 = vmax.f32 %v267, 0.0
  %v332 = vmax.f32 %v268, 0.0
  %v333 = vmax.f32 %v269, 0.0
  %v334 = vmax.f32 %v270, 0.0
  %v335 = vmax.f32 %v271, 0.0
  %v336 = vmax.f32 %v272, 0.0
  %v337 = vmax.f32 %v273, 0.0
  %v338 = vmax.f32 %v274, 0.0
  %v339 = vmax.f32 %v275, 0.0
  %v340 = vmax.f32 %v276, 0.0
  %v341 = vmax.f32 %v277, 0.0
  %v342 = vmax.f32 %v278, 0.0
  %v343 = vmax.f32 %v279, 0.0
  %v344 = vmax.f32 %v280, 0.0
  %v345 = vmax.f32 %v281, 0.0
  %v346 = vmax.f32 %v282, 0.0
  %v347 = vmax.f32 %v283, 0.0
  %v348 = vmin.f32 %v284, 6.0
  %v349 = vmin.f32 %v285, 6.0
  %v350 = vmin.f32 %v286, 6.0
  %v351 = vmin.f32 %v287, 6.0
  %v352 = vmin.f32 %v288, 6.0
  %v353 = vmin.f32 %v289, 6.0
  %v354 = vmin.f32 %v290, 6.0
  %v355 = vmin.f32 %v291, 6.0
  %v356 = vmin.f32 %v292, 6.0
  %v357 = vmin.f32 %v293, 6.0
  %v358 = vmin.f32 %v294, 6.0
  %v359 = vmin.f32 %v295, 6.0
  %v360 = vmin.f32 %v296, 6.0
  %v361 = vmin.f32 %v297, 6.0
  %v362 = vmin.f32 %v298, 6.0
  %v363 = vmin.f32 %v299, 6.0
  %v364 = vmin.f32 %v300, 6.0
  %v365 = vmin.f32 %v301, 6.0
  %v366 = vmin.f32 %v302, 6.0
  %v367 = vmin.f32 %v303, 6.0
  %v368 = vmin.f32 %v304, 6.0
  %v369 = vmin.f32 %v305, 6.0
  %v370 = vmin.f32 %v306, 6.0
  %v371 = vmin.f32 %v307, 6.0
  %v372 = vmin.f32 %v308, 6.0
  %v373 = vmin.f32 %v309, 6.0
  %v374 = vmin.f32 %v310, 6.0
  %v375 = vmin.f32 %v311, 6.0
  %v376 = vmin.f32 %v312, 6.0
  %v377 = vmin.f32 %v313, 6.0
  %v378 = vmin.f32 %v314, 6.0
  %v379 = vmin.f32 %v315, 6.0
  %v380 = vmin.f32 %v316, 6.0
  %v381 = vmin.f32 %v317, 6.0
  %v382 = vmin.f32 %v318, 6.0
  %v383 = vmin.f32 %v319, 6.0
  %v384 = vmin.f32 %v320, 6.0
  %v385 = vmin.f32 %v321, 6.0
  %v386 = vmin.f32 %v322, 6.0
  %v387 = vmin.f32 %v323, 6.0
  %v388 = vmin.f32 %v324, 6.0
  %v389 = vmin.f32 %v325, 6.0
  %v390 = vmin.f32 %v326, 6.0
  %v391 = vmin.f32 %v327, 6.0
  %v392 = vmin.f32 %v328, 6.0
  %v393 = vmin.f32 %v329, 6.0
  %v394 = vmin.f32 %v330, 6.0
  %v395 = vmin.f32 %v331, 6.0
  %v396 = vmin.f32 %v332, 6.0
  %v397 = vmin.f32 %v333, 6.0
  %v398 = vmin.f32 %v334, 6.0
  %v399 = vmin.f32 %v335, 6.0
  %v400 = vmin.f32 %v336, 6.0
  %v401 = vmin.f32 %v337, 6.0
  %v402 = vmin.f32 %v338, 6.0
  %v403 = vmin.f32 %v339, 6.0
  %v404 = vmin.f32 %v340, 6.0
  %v405 = vmin.f32 %v341, 6.0
  %v406 = vmin.f32 %v342, 6.0
  %v407 = vmin.f32 %v343, 6.0
  %v408 = vmin.f32 %v344, 6.0
  %v409 = vmin.f32 %v345, 6.0
  %v410 = vmin.f32 %v346, 6.0
  %v411 = vmin.f32 %v347, 6.0
  %v412 = vmul.f32 %v156, %v348
  %v413 = vmul.f32 %v157, %v349
  %v414 = vmul.f32 %v158, %v350
  %v415 = vmul.f32 %v159, %v351
  %v416 = vmul.f32 %v160, %v352
  %v417 = vmul.f32 %v161, %v353
  %v418 = vmul.f32 %v162, %v354
  %v419 = vmul.f32 %v163, %v355
  %v420 = vmul.f32 %v164, %v356
  %v421 = vmul.f32 %v165, %v357
  %v422 = vmul.f32 %v166, %v358
  %v423 = vmul.f32 %v167, %v359
  %v424 = vmul.f32 %v168, %v360
  %v425 = vmul.f32 %v169, %v361
  %v426 = vmul.f32 %v170, %v362
  %v427 = vmul.f32 %v171, %v363
  %v428 = vmul.f32 %v172, %v364
  %v429 = vmul.f32 %v173, %v365
  %v430 = vmul.f32 %v174, %v366
  %v431 = vmul.f32 %v175, %v367
  %v432 = vmul.f32 %v176, %v368
  %v433 = vmul.f32 %v177, %v369
  %v434 = vmul.f32 %v178, %v370
  %v435 = vmul.f32 %v179, %v371
  %v436 = vmul.f32 %v180, %v372
  %v437 = vmul.f32 %v181, %v373
  %v438 = vmul.f32 %v182, %v374
  %v439 = vmul.f32 %v183, %v375
  %v440 = vmul.f32 %v184, %v376
  %v441 = vmul.f32 %v185, %v377
  %v442 = vmul.f32 %v186, %v378
  %v443 = vmul.f32 %v187, %v379
  %v444 = vmul.f32 %v188, %v380
  %v445 = vmul.f32 %v189, %v381
  %v446 = vmul.f32 %v190, %v382
  %v447 = vmul.f32 %v191, %v383
  %v448 = vmul.f32 %v192, %v384
  %v449 = vmul.f32 %v193, %v385
  %v450 = vmul.f32 %v194, %v386
  %v451 = vmul.f32 %v195, %v387
  %v452 = vmul.f32 %v196, %v388
  %v453 = vmul.f32 %v197, %v389
  %v454 = vmul.f32 %v198, %v390
  %v455 = vmul.f32 %v199, %v391
  %v456 = vmul.f32 %v200, %v392
  %v457 = vmul.f32 %v201, %v393
  %v458 = vmul.f32 %v202, %v394
  %v459 = vmul.f32 %v203, %v395
  %v460 = vmul.f32 %v204, %v396
  %v461 = vmul.f32 %v205, %v397
  %v462 = vmul.f32 %v206, %v398
  %v463 = vmul.f32 %v207, %v399
  %v464 = vmul.f32 %v208, %v400
  %v465 = vmul.f32 %v209, %v401
  %v466 = vmul.f32 %v210, %v402
  %v467 = vmul.f32 %v211, %v403
  %v468 = vmul.f32 %v212, %v404
  %v469 = vmul.f32 %v213, %v405
  %v470 = vmul.f32 %v214, %v406
  %v471 = vmul.f32 %v215, %v407
  %v472 = vmul.f32 %v216, %v408
  %v473 = vmul.f32 %v217, %v409
  %v474 = vmul.f32 %v218, %v410
  %v475 = vmul.f32 %v219, %v411
  %v476 = vmul.f32 %v412, 0.16666667
  %v477 = vmul.f32 %v413, 0.16666667
  %v478 = vmul.f32 %v414, 0.16666667
  %v479 = vmul.f32 %v415, 0.16666667
  %v480 = vmul.f32 %v416, 0.16666667
  %v481 = vmul.f32 %v417, 0.16666667
  %v482 = vmul.f32 %v418, 0.16666667
  %v483 = vmul.f32 %v419, 0.16666667
  %v484 = vmul.f32 %v420, 0.16666667
  %v485 = vmul.f32 %v421, 0.16666667
  %v486 = vmul.f32 %v422, 0.16666667
  %v487 = vmul.f32 %v423, 0.16666667
  %v488 = vmul.f32 %v424, 0.16666667
  %v489 = vmul.f32 %v425, 0.16666667
  %v490 = vmul.f32 %v426, 0.16666667
  %v491 = vmul.f32 %v427, 0.16666667
  %v492 = vmul.f32 %v428, 0.16666667
  %v493 = vmul.f32 %v429, 0.16666667
  %v494 = vmul.f32 %v430, 0.16666667
  %v495 = vmul.f32 %v431, 0.16666667
  %v496 = vmul.f32 %v432, 0.16666667
  %v497 = vmul.f32 %v433, 0.16666667
  %v498 = vmul.f32 %v434, 0.16666667
  %v499 = vmul.f32 %v435, 0.16666667
  %v500 = vmul.f32 %v436, 0.16666667
  %v501 = vmul.f32 %v437, 0.16666667
  %v502 = vmul.f32 %v438, 0.16666667
  %v503 = vmul.f32 %v439, 0.16666667
  %v504 = vmul.f32 %v440, 0.16666667
  %v505 = vmul.f32 %v441, 0.16666667
  %v506 = vmul.f32 %v442, 0.16666667
  %v507 = vmul.f32 %v443, 0.16666667
  %v508 = vmul.f32 %v444, 0.16666667
  %v509 = vmul.f32 %v445, 0.16666667
  %v510 = vmul.f32 %v446, 0.16666667
  %v511 = vmul.f32 %v447, 0.16666667
  %v512 = vmul.f32 %v448, 0.16666667
  %v513 = vmul.f32 %v449, 0.16666667
  %v514 = vmul.f32 %v450, 0.16666667
  %v515 = vmul.f32 %v451, 0.16666667
  %v516 = vmul.f32 %v452, 0.16666667
  %v517 = vmul.f32 %v453, 0.16666667
  %v518 = vmul.f32 %v454, 0.16666667
  %v519 = vmul.f32 %v455, 0.16666667
  %v520 = vmul.f32 %v456, 0.16666667
  %v521 = vmul.f32 %v457, 0.16666667
  %v522 = vmul.f32 %v458, 0.16666667
  %v523 = vmul.f32 %v459, 0.16666667
  %v524 = vmul.f32 %v460, 0.16666667
  %v525 = vmul.f32 %v461, 0.16666667
  %v526 = vmul.f32 %v462, 0.16666667
  %v527 = vmul.f32 %v463, 0.16666667
  %v528 = vmul.f32 %v464, 0.16666667
  %v529 = vmul.f32 %v465, 0.16666667
  %v530 = vmul.f32 %v466, 0.16666667
  %v531 = vmul.f32 %v467, 0.16666667
  %v532 = vmul.f32 %v468, 0.16666667
  %v533 = vmul.f32 %v469, 0.16666667
  %v534 = vmul.f32 %v470, 0.16666667
  %v535 = vmul.f32 %v471, 0.16666667
  %v536 = vmul.f32 %v472, 0.16666667
  %v537 = vmul.f32 %v473, 0.16666667
  %v538 = vmul.f32 %v474, 0.16666667
  %v539 = vmul.f32 %v475, 0.16666667
  %540 = vst [vmem:[%s3] sm:$0xff] %v476
  %541 = vst [vmem:[%s3 + $0x8] sm:$0xff] %v477
  %542 = vst [vmem:[%s3 + $0x10] sm:$0xff] %v478
  %543 = vst [vmem:[%s3 + $0x18] sm:$0xff] %v479
  %544 = vst [vmem:[%s3 + $0x20] sm:$0xff] %v480
  %545 = vst [vmem:[%s3 + $0x28] sm:$0xff] %v481
  %546 = vst [vmem:[%s3 + $0x30] sm:$0xff] %v482
  %547 = vst [vmem:[%s3 + $0x38] sm:$0xff] %v483
  %548 = vst [vmem:[%s3 + $0x40] sm:$0xff] %v484
  %549 = vst [vmem:[%s3 + $0x48] sm:$0xff] %v485
  %550 = vst [vmem:[%s3 + $0x50] sm:$0xff] %v486
  %551 = vst [vmem:[%s3 + $0x58] sm:$0xff] %v487
  %552 = vst [vmem:[%s3 + $0x60] sm:$0xff] %v488
  %553 = vst [vmem:[%s3 + $0x68] sm:$0xff] %v489
  %554 = vst [vmem:[%s3 + $0x70] sm:$0xff] %v490
  %555 = vst [vmem:[%s3 + $0x78] sm:$0xff] %v491
  %556 = vst [vmem:[%s3 + $0x80] sm:$0xff] %v492
  %557 = vst [vmem:[%s3 + $0x88] sm:$0xff] %v493
  %558 = vst [vmem:[%s3 + $0x90] sm:$0xff] %v494
  %559 = vst [vmem:[%s3 + $0x98] sm:$0xff] %v495
  %560 = vst [vmem:[%s3 + $0xa0] sm:$0xff] %v496
  %561 = vst [vmem:[%s3 + $0xa8] sm:$0xff] %v497
  %562 = vst [vmem:[%s3 + $0xb0] sm:$0xff] %v498
  %563 = vst [vmem:[%s3 + $0xb8] sm:$0xff] %v499
  %564 = vst [vmem:[%s3 + $0xc0] sm:$0xff] %v500
  %565 = vst [vmem:[%s3 + $0xc8] sm:$0xff] %v501
  %566 = vst [vmem:[%s3 + $0xd0] sm:$0xff] %v502
  %567 = vst [vmem:[%s3 + $0xd8] sm:$0xff] %v503
  %568 = vst [vmem:[%s3 + $0xe0] sm:$0xff] %v504
  %569 = vst [vmem:[%s3 + $0xe8] sm:$0xff] %v505
  %570 = vst [vmem:[%s3 + $0xf0] sm:$0xff] %v506
  %571 = vst [vmem:[%s3 + $0xf8] sm:$0xff] %v507
  %572 = vst [vmem:[%s3 + $0x100] sm:$0xff] %v508
  %573 = vst [vmem:[%s3 + $0x108] sm:$0xff] %v509
  %574 = vst [vmem:[%s3 + $0x110] sm:$0xff] %v510
  %575 = vst [vmem:[%s3 + $0x118] sm:$0xff] %v511
  %576 = vst [vmem:[%s3 + $0x120] sm:$0xff] %v512
  %577 = vst [vmem:[%s3 + $0x128] sm:$0xff] %v513
  %578 = vst [vmem:[%s3 + $0x130] sm:$0xff] %v514
  %579 = vst [vmem:[%s3 + $0x138] sm:$0xff] %v515
  %580 = vst [vmem:[%s3 + $0x140] sm:$0xff] %v516
  %581 = vst [vmem:[%s3 + $0x148] sm:$0xff] %v517
  %582 = vst [vmem:[%s3 + $0x150] sm:$0xff] %v518
  %583 = vst [vmem:[%s3 + $0x158] sm:$0xff] %v519
  %584 = vst [vmem:[%s3 + $0x160] sm:$0xff] %v520
  %585 = vst [vmem:[%s3 + $0x168] sm:$0xff] %v521
  %586 = vst [vmem:[%s3 + $0x170] sm:$0xff] %v522
  %587 = vst [vmem:[%s3 + $0x178] sm:$0xff] %v523
  %588 = vst [vmem:[%s3 + $0x180] sm:$0xff] %v524
  %589 = vst [vmem:[%s3 + $0x188] sm:$0xff] %v525
  %590 = vst [vmem:[%s3 + $0x190] sm:$0xff] %v526
  %591 = vst [vmem:[%s3 + $0x198] sm:$0xff] %v527
  %592 = vst [vmem:[%s3 + $0x1a0] sm:$0xff] %v528
  %593 = vst [vmem:[%s3 + $0x1a8] sm:$0xff] %v529
  %594 = vst [vmem:[%s3 + $0x1b0] sm:$0xff] %v530
  %595 = vst [vmem:[%s3 + $0x1b8] sm:$0xff] %v531
  %596 = vst [vmem:[%s3 + $0x1c0] sm:$0xff] %v532
  %597 = vst [vmem:[%s3 + $0x1c8] sm:$0xff] %v533
  %598 = vst [vmem:[%s3 + $0x1d0] sm:$0xff] %v534
  %599 = vst [vmem:[%s3 + $0x1d8] sm:$0xff] %v535
  %600 = vst [vmem:[%s3 + $0x1e0] sm:$0xff] %v536
  %601 = vst [vmem:[%s3 + $0x1e8] sm:$0xff] %v537
  %602 = vst [vmem:[%s3 + $0x1f0] sm:$0xff] %v538
  %603 = vst [vmem:[%s3 + $0x1f8] sm:$0xff] %v539
  // Predicated region
  $region14: #{conv_set_forward.3} parent=0 // pred_check
    _
  $region15: #{conv_set_forward.3} parent=0 // pred_check_branch
    %605 = sbr.rel (0) target = $region17
  $region16: #{conv_set_forward.3} parent=0 // pred_region
    _
  $region17: #{conv_set_forward.3} parent=0 // pred_fallthru
    _
  // Predicated region
  $region18: #{conv_set_forward.3} parent=0 // pred_check
    _
  $region19: #{conv_set_forward.3} parent=0 // pred_check_branch
    %607 = sbr.rel (0) target = $region21
  $region20: #{conv_set_forward.3} parent=0 // pred_region
    _
  $region21: #{conv_set_forward.3} parent=0 // pred_fallthru
    _

// kernel: conv_set_forward.2
$region0: #{conv_set_forward.2}
  #allocation0 [shape = 'u32[]', space=smem, size = 0x4, offset = 0x4, fixed_abs, tag = 'smem constant byte address 0x4 - core index']
  #allocation1 [shape = 'u32[144,128]{1,0:T(1,128)}', space=vmem, size = 0x12000, scoped, tag = 'internal scratch']
  %s0 = inlined_call_operand.vmem [shape: bf16[512,36], index: 0, kind: input, shape index: {}]
  %s1 = inlined_call_operand.vmem [shape: bf16[36,128], index: 1, kind: input, shape index: {}]
  %s2 = inlined_call_operand.vmem [shape: f32[512,128], index: 2, kind: output, shape index: {0}]
  %s3 = inlined_call_operand.vmem [shape: f32[8,128], index: 3, kind: output, shape index: {1}]
  %s4 = inlined_call_operand.vmem [shape: f32[8,128], index: 4, kind: output, shape index: {2}]
  %5 = xla_tuple %s2, %s3, %s4
  %s6 = sld [smem:[#allocation0]]
  $region34: #{conv_set_forward.2} parent=0
    _
  %s8 = ssub.s32 1, %s6
  %s9 = scalar_select 0, %s8, %s6
  // Predicated region
  $region2: #{conv_set_forward.2} parent=0 // pred_check
    _
  $region3: #{conv_set_forward.2} parent=0 // pred_check_branch
    %11 = sbr.rel (0) target = $region5
  $region4: #{conv_set_forward.2} parent=0 // pred_region
    _
  $region5: #{conv_set_forward.2} parent=0 // pred_fallthru
    _
  // Predicated region
  $region6: #{conv_set_forward.2} parent=0 // pred_check
    _
  $region7: #{conv_set_forward.2} parent=0 // pred_check_branch
    %13 = sbr.rel (0) target = $region9
  $region8: #{conv_set_forward.2} parent=0 // pred_region
    _
  $region9: #{conv_set_forward.2} parent=0 // pred_fallthru
    _
  %v15 = vld [vmem:[%s0] sm:$0xf]
  %v16 = vld [vmem:[%s0 + $0x4] sm:$0xf]
  %v17 = vld [vmem:[%s0 + $0x8] sm:$0xf]
  %v18 = vld [vmem:[%s0 + $0xc] sm:$0xf]
  %v19 = vld [vmem:[%s0 + $0x10] sm:$0xf]
  %v20 = vld [vmem:[%s0 + $0x14] sm:$0xf]
  %v21 = vld [vmem:[%s0 + $0x18] sm:$0xf]
  %v22 = vld [vmem:[%s0 + $0x1c] sm:$0xf]
  %v23 = vld [vmem:[%s0 + $0x20] sm:$0xf]
  %v24 = vld [vmem:[%s0 + $0x24] sm:$0xf]
  %v25 = vld [vmem:[%s0 + $0x28] sm:$0xf]
  %v26 = vld [vmem:[%s0 + $0x2c] sm:$0xf]
  %v27 = vld [vmem:[%s0 + $0x30] sm:$0xf]
  %v28 = vld [vmem:[%s0 + $0x34] sm:$0xf]
  %v29 = vld [vmem:[%s0 + $0x38] sm:$0xf]
  %v30 = vld [vmem:[%s0 + $0x3c] sm:$0xf]
  %v31 = vld [vmem:[%s0 + $0x40] sm:$0xf]
  %v32 = vld [vmem:[%s0 + $0x44] sm:$0xf]
  %v33 = vld [vmem:[%s0 + $0x48] sm:$0xf]
  %v34 = vld [vmem:[%s0 + $0x4c] sm:$0xf]
  %v35 = vld [vmem:[%s0 + $0x50] sm:$0xf]
  %v36 = vld [vmem:[%s0 + $0x54] sm:$0xf]
  %v37 = vld [vmem:[%s0 + $0x58] sm:$0xf]
  %v38 = vld [vmem:[%s0 + $0x5c] sm:$0xf]
  %v39 = vld [vmem:[%s0 + $0x60] sm:$0xf]
  %v40 = vld [vmem:[%s0 + $0x64] sm:$0xf]
  %v41 = vld [vmem:[%s0 + $0x68] sm:$0xf]
  %v42 = vld [vmem:[%s0 + $0x6c] sm:$0xf]
  %v43 = vld [vmem:[%s0 + $0x70] sm:$0xf]
  %v44 = vld [vmem:[%s0 + $0x74] sm:$0xf]
  %v45 = vld [vmem:[%s0 + $0x78] sm:$0xf]
  %v46 = vld [vmem:[%s0 + $0x7c] sm:$0xf]
  %v47 = vld [vmem:[%s0 + $0x80] sm:$0xf]
  %v48 = vld [vmem:[%s0 + $0x84] sm:$0xf]
  %v49 = vld [vmem:[%s0 + $0x88] sm:$0xf]
  %v50 = vld [vmem:[%s0 + $0x8c] sm:$0xf]
  %v51 = vld [vmem:[%s0 + $0x90] sm:$0xf]
  %v52 = vld [vmem:[%s0 + $0x94] sm:$0xf]
  %v53 = vld [vmem:[%s0 + $0x98] sm:$0xf]
  %v54 = vld [vmem:[%s0 + $0x9c] sm:$0xf]
  %v55 = vld [vmem:[%s0 + $0xa0] sm:$0xf]
  %v56 = vld [vmem:[%s0 + $0xa4] sm:$0xf]
  %v57 = vld [vmem:[%s0 + $0xa8] sm:$0xf]
  %v58 = vld [vmem:[%s0 + $0xac] sm:$0xf]
  %v59 = vld [vmem:[%s0 + $0xb0] sm:$0xf]
  %v60 = vld [vmem:[%s0 + $0xb4] sm:$0xf]
  %v61 = vld [vmem:[%s0 + $0xb8] sm:$0xf]
  %v62 = vld [vmem:[%s0 + $0xbc] sm:$0xf]
  %v63 = vld [vmem:[%s0 + $0xc0] sm:$0xf]
  %v64 = vld [vmem:[%s0 + $0xc4] sm:$0xf]
  %v65 = vld [vmem:[%s0 + $0xc8] sm:$0xf]
  %v66 = vld [vmem:[%s0 + $0xcc] sm:$0xf]
  %v67 = vld [vmem:[%s0 + $0xd0] sm:$0xf]
  %v68 = vld [vmem:[%s0 + $0xd4] sm:$0xf]
  %v69 = vld [vmem:[%s0 + $0xd8] sm:$0xf]
  %v70 = vld [vmem:[%s0 + $0xdc] sm:$0xf]
  %v71 = vld [vmem:[%s0 + $0xe0] sm:$0xf]
  %v72 = vld [vmem:[%s0 + $0xe4] sm:$0xf]
  %v73 = vld [vmem:[%s0 + $0xe8] sm:$0xf]
  %v74 = vld [vmem:[%s0 + $0xec] sm:$0xf]
  %v75 = vld [vmem:[%s0 + $0xf0] sm:$0xf]
  %v76 = vld [vmem:[%s0 + $0xf4] sm:$0xf]
  %v77 = vld [vmem:[%s0 + $0xf8] sm:$0xf]
  %v78 = vld [vmem:[%s0 + $0xfc] sm:$0xf]
  %v79 = vld [vmem:[%s1] sm:$0xf]
  %v80 = vld [vmem:[%s1 + $0x4] sm:$0xf]
  %v81 = vld [vmem:[%s1 + $0x8] sm:$0xf]
  %v82 = vld [vmem:[%s1 + $0xc] sm:$0xf]
  %v83 = vld [vmem:[%s1 + $0x10] sm:$0x3]
  %v148 = vunpack.c.l.b16 %v15
  %v149 = vunpack.c.l.b16 %v16
  %v150 = vunpack.c.l.b16 %v17
  %v151 = vunpack.c.l.b16 %v18
  %v152 = vunpack.c.l.b16 %v19
  %v153 = vunpack.c.l.b16 %v20
  %v154 = vunpack.c.l.b16 %v21
  %v155 = vunpack.c.l.b16 %v22
  %v156 = vunpack.c.l.b16 %v23
  %v157 = vunpack.c.l.b16 %v24
  %v158 = vunpack.c.l.b16 %v25
  %v159 = vunpack.c.l.b16 %v26
  %v160 = vunpack.c.l.b16 %v27
  %v161 = vunpack.c.l.b16 %v28
  %v162 = vunpack.c.l.b16 %v29
  %v163 = vunpack.c.l.b16 %v30
  %v164 = vunpack.c.l.b16 %v31
  %v165 = vunpack.c.l.b16 %v32
  %v166 = vunpack.c.l.b16 %v33
  %v167 = vunpack.c.l.b16 %v34
  %v168 = vunpack.c.l.b16 %v35
  %v169 = vunpack.c.l.b16 %v36
  %v170 = vunpack.c.l.b16 %v37
  %v171 = vunpack.c.l.b16 %v38
  %v172 = vunpack.c.l.b16 %v39
  %v173 = vunpack.c.l.b16 %v40
  %v174 = vunpack.c.l.b16 %v41
  %v175 = vunpack.c.l.b16 %v42
  %v176 = vunpack.c.l.b16 %v43
  %v177 = vunpack.c.l.b16 %v44
  %v178 = vunpack.c.l.b16 %v45
  %v179 = vunpack.c.l.b16 %v46
  %v180 = vunpack.c.l.b16 %v47
  %v181 = vunpack.c.l.b16 %v48
  %v182 = vunpack.c.l.b16 %v49
  %v183 = vunpack.c.l.b16 %v50
  %v184 = vunpack.c.l.b16 %v51
  %v185 = vunpack.c.l.b16 %v52
  %v186 = vunpack.c.l.b16 %v53
  %v187 = vunpack.c.l.b16 %v54
  %v188 = vunpack.c.l.b16 %v55
  %v189 = vunpack.c.l.b16 %v56
  %v190 = vunpack.c.l.b16 %v57
  %v191 = vunpack.c.l.b16 %v58
  %v192 = vunpack.c.l.b16 %v59
  %v193 = vunpack.c.l.b16 %v60
  %v194 = vunpack.c.l.b16 %v61
  %v195 = vunpack.c.l.b16 %v62
  %v196 = vunpack.c.l.b16 %v63
  %v197 = vunpack.c.l.b16 %v64
  %v198 = vunpack.c.l.b16 %v65
  %v199 = vunpack.c.l.b16 %v66
  %v200 = vunpack.c.l.b16 %v67
  %v201 = vunpack.c.l.b16 %v68
  %v202 = vunpack.c.l.b16 %v69
  %v203 = vunpack.c.l.b16 %v70
  %v204 = vunpack.c.l.b16 %v71
  %v205 = vunpack.c.l.b16 %v72
  %v206 = vunpack.c.l.b16 %v73
  %v207 = vunpack.c.l.b16 %v74
  %v208 = vunpack.c.l.b16 %v75
  %v209 = vunpack.c.l.b16 %v76
  %v210 = vunpack.c.l.b16 %v77
  %v211 = vunpack.c.l.b16 %v78
  %v212 = vpack.c.b16 %v149, %v148
  %v213 = vpack.c.b16 %v151, %v150
  %v214 = vpack.c.b16 %v153, %v152
  %v215 = vpack.c.b16 %v155, %v154
  %v216 = vpack.c.b16 %v157, %v156
  %v217 = vpack.c.b16 %v159, %v158
  %v218 = vpack.c.b16 %v161, %v160
  %v219 = vpack.c.b16 %v163, %v162
  %v220 = vpack.c.b16 %v165, %v164
  %v221 = vpack.c.b16 %v167, %v166
  %v222 = vpack.c.b16 %v169, %v168
  %v223 = vpack.c.b16 %v171, %v170
  %v224 = vpack.c.b16 %v173, %v172
  %v225 = vpack.c.b16 %v175, %v174
  %v226 = vpack.c.b16 %v177, %v176
  %v227 = vpack.c.b16 %v179, %v178
  %v228 = vpack.c.b16 %v181, %v180
  %v229 = vpack.c.b16 %v183, %v182
  %v230 = vpack.c.b16 %v185, %v184
  %v231 = vpack.c.b16 %v187, %v186
  %v232 = vpack.c.b16 %v189, %v188
  %v233 = vpack.c.b16 %v191, %v190
  %v234 = vpack.c.b16 %v193, %v192
  %v235 = vpack.c.b16 %v195, %v194
  %v236 = vpack.c.b16 %v197, %v196
  %v237 = vpack.c.b16 %v199, %v198
  %v238 = vpack.c.b16 %v201, %v200
  %v239 = vpack.c.b16 %v203, %v202
  %v240 = vpack.c.b16 %v205, %v204
  %v241 = vpack.c.b16 %v207, %v206
  %v242 = vpack.c.b16 %v209, %v208
  %v243 = vpack.c.b16 %v211, %v210
  %v249 = vunpack.c.l.b16 %v79
  %v250 = vunpack.c.l.b16 %v80
  %v251 = vunpack.c.l.b16 %v81
  %v252 = vunpack.c.l.b16 %v82
  %v253 = vunpack.c.l.b16 %v83
  %v254 = vpack.c.b16 %v250, %v249
  %v255 = vpack.c.b16 %v252, %v251
  %v256 = vpack.c.b16 %v253, %v253
  %vm259 = vcmask 293888
  %v261 = vsel %vm259, %v212, 0
  %v264 = vsel %vm259, %v213, 0
  %v267 = vsel %vm259, %v214, 0
  %v270 = vsel %vm259, %v215, 0
  %v273 = vsel %vm259, %v216, 0
  %v276 = vsel %vm259, %v217, 0
  %v279 = vsel %vm259, %v218, 0
  %v282 = vsel %vm259, %v219, 0
  %v285 = vsel %vm259, %v220, 0
  %v288 = vsel %vm259, %v221, 0
  %v291 = vsel %vm259, %v222, 0
  %v294 = vsel %vm259, %v223, 0
  %v297 = vsel %vm259, %v224, 0
  %v300 = vsel %vm259, %v225, 0
  %v303 = vsel %vm259, %v226, 0
  %v306 = vsel %vm259, %v227, 0
  %v309 = vsel %vm259, %v228, 0
  %v312 = vsel %vm259, %v229, 0
  %v315 = vsel %vm259, %v230, 0
  %v318 = vsel %vm259, %v231, 0
  %v321 = vsel %vm259, %v232, 0
  %v324 = vsel %vm259, %v233, 0
  %v327 = vsel %vm259, %v234, 0
  %v330 = vsel %vm259, %v235, 0
  %v333 = vsel %vm259, %v236, 0
  %v336 = vsel %vm259, %v237, 0
  %v339 = vsel %vm259, %v238, 0
  %v342 = vsel %vm259, %v239, 0
  %v345 = vsel %vm259, %v240, 0
  %v348 = vsel %vm259, %v241, 0
  %v351 = vsel %vm259, %v242, 0
  %v354 = vsel %vm259, %v243, 0
  %vm356 = vcmask 1041408
  %v358 = vsel %vm356, %v256, 0
  %360 = vmatprep.subr.bf16.mxu0 0
  %361 = vmatpush1.bf16.msra.mxu0 0
  %362 = vmatprep.subr.bf16.mxu0 0
  %363 = vmatpush1.bf16.msra.mxu0 0
  %364 = vmatprep.subr.bf16.mxu0 0
  %365 = vmatpush1.bf16.msra.mxu0 0
  %366 = vmatprep.subr.bf16.mxu0 0
  %367 = vmatpush1.bf16.msra.mxu0 0
  %368 = vmatprep.subr.bf16.mxu0 0
  %369 = vmatpush1.bf16.msra.mxu0 0
  %370 = vmatprep.subr.bf16.mxu0 0
  %371 = vmatpush1.bf16.msra.mxu0 %v358
  %372 = vmatprep.subr.bf16.mxu0 0
  %373 = vmatpush1.bf16.msra.mxu0 %v255
  %374 = vmatprep.subr.bf16.mxu0 0
  %375 = vmatpush1.bf16.msra.mxu0 %v254
  %376 = vmatprep.subr.bf16.mxu0 0
  %377 = vmatpush2.bf16.msra.mxu0 0
  %378 = vmatprep.subr.bf16.mxu0 0
  %379 = vmatpush2.bf16.msra.mxu0 0
  %380 = vmatprep.subr.bf16.mxu0 0
  %381 = vmatpush2.bf16.msra.mxu0 0
  %382 = vmatprep.subr.bf16.mxu0 0
  %383 = vmatpush2.bf16.msra.mxu0 0
  %384 = vmatprep.subr.bf16.mxu0 0
  %385 = vmatpush2.bf16.msra.mxu0 0
  %386 = vmatprep.subr.bf16.mxu0 0
  %387 = vmatpush2.bf16.msra.mxu0 0
  %388 = vmatprep.subr.bf16.mxu0 0
  %389 = vmatpush2.bf16.msra.mxu0 0
  %390 = vmatprep.subr.bf16.mxu0 0
  %391 = vmatpush2.bf16.msra.mxu0 0
  %392 = vmatprep.mubr.bf16.mxu0 0
  %393 = vmatmul.mubr.bf16.gmra.mxu0 %v261
  %v394 = vpop.f32.mrf.mxu0
  %v395 = vadd.f32 0.0, %v394
  %v396 = vpop.f32.mrf.mxu0
  %v397 = vpop.f32.mrf.mxu0
  %v398 = vadd.f32 0.0, %v397
  %v399 = vpop.f32.mrf.mxu0
  %400 = vmatprep.mubr.bf16.mxu0 0
  %401 = vmatmul.mubr.bf16.gmra.mxu0 %v264
  %v402 = vpop.f32.mrf.mxu0
  %v403 = vadd.f32 0.0, %v402
  %v404 = vpop.f32.mrf.mxu0
  %v405 = vpop.f32.mrf.mxu0
  %v406 = vadd.f32 0.0, %v405
  %v407 = vpop.f32.mrf.mxu0
  %408 = vmatprep.mubr.bf16.mxu0 0
  %409 = vmatmul.mubr.bf16.gmra.mxu0 %v267
  %v410 = vpop.f32.mrf.mxu0
  %v411 = vadd.f32 0.0, %v410
  %v412 = vpop.f32.mrf.mxu0
  %v413 = vpop.f32.mrf.mxu0
  %v414 = vadd.f32 0.0, %v413
  %v415 = vpop.f32.mrf.mxu0
  %416 = vmatprep.mubr.bf16.mxu0 0
  %417 = vmatmul.mubr.bf16.gmra.mxu0 %v270
  %v418 = vpop.f32.mrf.mxu0
  %v419 = vadd.f32 0.0, %v418
  %v420 = vpop.f32.mrf.mxu0
  %v421 = vpop.f32.mrf.mxu0
  %v422 = vadd.f32 0.0, %v421
  %v423 = vpop.f32.mrf.mxu0
  %424 = vmatprep.mubr.bf16.mxu0 0
  %425 = vmatmul.mubr.bf16.gmra.mxu0 %v273
  %v426 = vpop.f32.mrf.mxu0
  %v427 = vadd.f32 0.0, %v426
  %v428 = vpop.f32.mrf.mxu0
  %v429 = vpop.f32.mrf.mxu0
  %v430 = vadd.f32 0.0, %v429
  %v431 = vpop.f32.mrf.mxu0
  %432 = vmatprep.mubr.bf16.mxu0 0
  %433 = vmatmul.mubr.bf16.gmra.mxu0 %v276
  %v434 = vpop.f32.mrf.mxu0
  %v435 = vadd.f32 0.0, %v434
  %v436 = vpop.f32.mrf.mxu0
  %v437 = vpop.f32.mrf.mxu0
  %v438 = vadd.f32 0.0, %v437
  %v439 = vpop.f32.mrf.mxu0
  %440 = vmatprep.mubr.bf16.mxu0 0
  %441 = vmatmul.mubr.bf16.gmra.mxu0 %v279
  %v442 = vpop.f32.mrf.mxu0
  %v443 = vadd.f32 0.0, %v442
  %v444 = vpop.f32.mrf.mxu0
  %v445 = vpop.f32.mrf.mxu0
  %v446 = vadd.f32 0.0, %v445
  %v447 = vpop.f32.mrf.mxu0
  %448 = vmatprep.mubr.bf16.mxu0 0
  %449 = vmatmul.mubr.bf16.gmra.mxu0 %v282
  %v450 = vpop.f32.mrf.mxu0
  %v451 = vadd.f32 0.0, %v450
  %v452 = vpop.f32.mrf.mxu0
  %v453 = vpop.f32.mrf.mxu0
  %v454 = vadd.f32 0.0, %v453
  %v455 = vpop.f32.mrf.mxu0
  %456 = vmatprep.mubr.bf16.mxu0 0
  %457 = vmatmul.mubr.bf16.gmra.mxu0 %v285
  %v458 = vpop.f32.mrf.mxu0
  %v459 = vadd.f32 0.0, %v458
  %v460 = vpop.f32.mrf.mxu0
  %v461 = vpop.f32.mrf.mxu0
  %v462 = vadd.f32 0.0, %v461
  %v463 = vpop.f32.mrf.mxu0
  %464 = vmatprep.mubr.bf16.mxu0 0
  %465 = vmatmul.mubr.bf16.gmra.mxu0 %v288
  %v466 = vpop.f32.mrf.mxu0
  %v467 = vadd.f32 0.0, %v466
  %v468 = vpop.f32.mrf.mxu0
  %v469 = vpop.f32.mrf.mxu0
  %v470 = vadd.f32 0.0, %v469
  %v471 = vpop.f32.mrf.mxu0
  %472 = vmatprep.mubr.bf16.mxu0 0
  %473 = vmatmul.mubr.bf16.gmra.mxu0 %v291
  %v474 = vpop.f32.mrf.mxu0
  %v475 = vadd.f32 0.0, %v474
  %v476 = vpop.f32.mrf.mxu0
  %v477 = vpop.f32.mrf.mxu0
  %v478 = vadd.f32 0.0, %v477
  %v479 = vpop.f32.mrf.mxu0
  %480 = vmatprep.mubr.bf16.mxu0 0
  %481 = vmatmul.mubr.bf16.gmra.mxu0 %v294
  %v482 = vpop.f32.mrf.mxu0
  %v483 = vadd.f32 0.0, %v482
  %v484 = vpop.f32.mrf.mxu0
  %v485 = vpop.f32.mrf.mxu0
  %v486 = vadd.f32 0.0, %v485
  %v487 = vpop.f32.mrf.mxu0
  %488 = vmatprep.mubr.bf16.mxu0 0
  %489 = vmatmul.mubr.bf16.gmra.mxu0 %v297
  %v490 = vpop.f32.mrf.mxu0
  %v491 = vadd.f32 0.0, %v490
  %v492 = vpop.f32.mrf.mxu0
  %v493 = vpop.f32.mrf.mxu0
  %v494 = vadd.f32 0.0, %v493
  %v495 = vpop.f32.mrf.mxu0
  %496 = vmatprep.mubr.bf16.mxu0 0
  %497 = vmatmul.mubr.bf16.gmra.mxu0 %v300
  %v498 = vpop.f32.mrf.mxu0
  %v499 = vadd.f32 0.0, %v498
  %v500 = vpop.f32.mrf.mxu0
  %v501 = vpop.f32.mrf.mxu0
  %v502 = vadd.f32 0.0, %v501
  %v503 = vpop.f32.mrf.mxu0
  %504 = vmatprep.mubr.bf16.mxu0 0
  %505 = vmatmul.mubr.bf16.gmra.mxu0 %v303
  %v506 = vpop.f32.mrf.mxu0
  %v507 = vadd.f32 0.0, %v506
  %v508 = vpop.f32.mrf.mxu0
  %v509 = vpop.f32.mrf.mxu0
  %v510 = vadd.f32 0.0, %v509
  %v511 = vpop.f32.mrf.mxu0
  %512 = vmatprep.mubr.bf16.mxu0 0
  %513 = vmatmul.mubr.bf16.gmra.mxu0 %v306
  %v514 = vpop.f32.mrf.mxu0
  %v515 = vadd.f32 0.0, %v514
  %v516 = vpop.f32.mrf.mxu0
  %v517 = vpop.f32.mrf.mxu0
  %v518 = vadd.f32 0.0, %v517
  %v519 = vpop.f32.mrf.mxu0
  %520 = vmatprep.mubr.bf16.mxu0 0
  %521 = vmatmul.mubr.bf16.gmra.mxu0 %v309
  %v522 = vpop.f32.mrf.mxu0
  %v523 = vadd.f32 0.0, %v522
  %v524 = vpop.f32.mrf.mxu0
  %v525 = vpop.f32.mrf.mxu0
  %v526 = vadd.f32 0.0, %v525
  %v527 = vpop.f32.mrf.mxu0
  %528 = vmatprep.mubr.bf16.mxu0 0
  %529 = vmatmul.mubr.bf16.gmra.mxu0 %v312
  %v530 = vpop.f32.mrf.mxu0
  %v531 = vadd.f32 0.0, %v530
  %v532 = vpop.f32.mrf.mxu0
  %v533 = vpop.f32.mrf.mxu0
  %v534 = vadd.f32 0.0, %v533
  %v535 = vpop.f32.mrf.mxu0
  %536 = vmatprep.mubr.bf16.mxu0 0
  %537 = vmatmul.mubr.bf16.gmra.mxu0 %v315
  %v538 = vpop.f32.mrf.mxu0
  %v539 = vadd.f32 0.0, %v538
  %v540 = vpop.f32.mrf.mxu0
  %v541 = vpop.f32.mrf.mxu0
  %v542 = vadd.f32 0.0, %v541
  %v543 = vpop.f32.mrf.mxu0
  %544 = vmatprep.mubr.bf16.mxu0 0
  %545 = vmatmul.mubr.bf16.gmra.mxu0 %v318
  %v546 = vpop.f32.mrf.mxu0
  %v547 = vadd.f32 0.0, %v546
  %v548 = vpop.f32.mrf.mxu0
  %v549 = vpop.f32.mrf.mxu0
  %v550 = vadd.f32 0.0, %v549
  %v551 = vpop.f32.mrf.mxu0
  %552 = vmatprep.mubr.bf16.mxu0 0
  %553 = vmatmul.mubr.bf16.gmra.mxu0 %v321
  %v554 = vpop.f32.mrf.mxu0
  %v555 = vadd.f32 0.0, %v554
  %v556 = vpop.f32.mrf.mxu0
  %v557 = vpop.f32.mrf.mxu0
  %v558 = vadd.f32 0.0, %v557
  %v559 = vpop.f32.mrf.mxu0
  %560 = vmatprep.mubr.bf16.mxu0 0
  %561 = vmatmul.mubr.bf16.gmra.mxu0 %v324
  %v562 = vpop.f32.mrf.mxu0
  %v563 = vadd.f32 0.0, %v562
  %v564 = vpop.f32.mrf.mxu0
  %v565 = vpop.f32.mrf.mxu0
  %v566 = vadd.f32 0.0, %v565
  %v567 = vpop.f32.mrf.mxu0
  %568 = vmatprep.mubr.bf16.mxu0 0
  %569 = vmatmul.mubr.bf16.gmra.mxu0 %v327
  %v570 = vpop.f32.mrf.mxu0
  %v571 = vadd.f32 0.0, %v570
  %v572 = vpop.f32.mrf.mxu0
  %v573 = vpop.f32.mrf.mxu0
  %v574 = vadd.f32 0.0, %v573
  %v575 = vpop.f32.mrf.mxu0
  %576 = vmatprep.mubr.bf16.mxu0 0
  %577 = vmatmul.mubr.bf16.gmra.mxu0 %v330
  %v578 = vpop.f32.mrf.mxu0
  %v579 = vadd.f32 0.0, %v578
  %v580 = vpop.f32.mrf.mxu0
  %v581 = vpop.f32.mrf.mxu0
  %v582 = vadd.f32 0.0, %v581
  %v583 = vpop.f32.mrf.mxu0
  %584 = vmatprep.mubr.bf16.mxu0 0
  %585 = vmatmul.mubr.bf16.gmra.mxu0 %v333
  %v586 = vpop.f32.mrf.mxu0
  %v587 = vadd.f32 0.0, %v586
  %v588 = vpop.f32.mrf.mxu0
  %v589 = vpop.f32.mrf.mxu0
  %v590 = vadd.f32 0.0, %v589
  %v591 = vpop.f32.mrf.mxu0
  %592 = vmatprep.mubr.bf16.mxu0 0
  %593 = vmatmul.mubr.bf16.gmra.mxu0 %v336
  %v594 = vpop.f32.mrf.mxu0
  %v595 = vadd.f32 0.0, %v594
  %v596 = vpop.f32.mrf.mxu0
  %v597 = vpop.f32.mrf.mxu0
  %v598 = vadd.f32 0.0, %v597
  %v599 = vpop.f32.mrf.mxu0
  %600 = vmatprep.mubr.bf16.mxu0 0
  %601 = vmatmul.mubr.bf16.gmra.mxu0 %v339
  %v602 = vpop.f32.mrf.mxu0
  %v603 = vadd.f32 0.0, %v602
  %v604 = vpop.f32.mrf.mxu0
  %v605 = vpop.f32.mrf.mxu0
  %v606 = vadd.f32 0.0, %v605
  %v607 = vpop.f32.mrf.mxu0
  %608 = vmatprep.mubr.bf16.mxu0 0
  %609 = vmatmul.mubr.bf16.gmra.mxu0 %v342
  %v610 = vpop.f32.mrf.mxu0
  %v611 = vadd.f32 0.0, %v610
  %v612 = vpop.f32.mrf.mxu0
  %v613 = vpop.f32.mrf.mxu0
  %v614 = vadd.f32 0.0, %v613
  %v615 = vpop.f32.mrf.mxu0
  %616 = vmatprep.mubr.bf16.mxu0 0
  %617 = vmatmul.mubr.bf16.gmra.mxu0 %v345
  %v618 = vpop.f32.mrf.mxu0
  %v619 = vadd.f32 0.0, %v618
  %v620 = vpop.f32.mrf.mxu0
  %v621 = vpop.f32.mrf.mxu0
  %v622 = vadd.f32 0.0, %v621
  %v623 = vpop.f32.mrf.mxu0
  %624 = vmatprep.mubr.bf16.mxu0 0
  %625 = vmatmul.mubr.bf16.gmra.mxu0 %v348
  %v626 = vpop.f32.mrf.mxu0
  %v627 = vadd.f32 0.0, %v626
  %v628 = vpop.f32.mrf.mxu0
  %v629 = vpop.f32.mrf.mxu0
  %v630 = vadd.f32 0.0, %v629
  %v631 = vpop.f32.mrf.mxu0
  %632 = vmatprep.mubr.bf16.mxu0 0
  %633 = vmatmul.mubr.bf16.gmra.mxu0 %v351
  %v634 = vpop.f32.mrf.mxu0
  %v635 = vadd.f32 0.0, %v634
  %v636 = vpop.f32.mrf.mxu0
  %v637 = vpop.f32.mrf.mxu0
  %v638 = vadd.f32 0.0, %v637
  %v639 = vpop.f32.mrf.mxu0
  %640 = vmatprep.mubr.bf16.mxu0 0
  %641 = vmatmul.mubr.bf16.gmra.mxu0 %v354
  %v642 = vpop.f32.mrf.mxu0
  %v643 = vadd.f32 0.0, %v642
  %v644 = vpop.f32.mrf.mxu0
  %v645 = vpop.f32.mrf.mxu0
  %v646 = vadd.f32 0.0, %v645
  %v647 = vpop.f32.mrf.mxu0
  %648 = vdwg.mxu0
  %649 = vst [vmem:[%s2] sm:$0xff] %v395
  %650 = vst [vmem:[%s2 + $0x8] sm:$0xff] %v398
  %651 = vst [vmem:[%s2 + $0x10] sm:$0xff] %v403
  %652 = vst [vmem:[%s2 + $0x18] sm:$0xff] %v406
  %653 = vst [vmem:[%s2 + $0x20] sm:$0xff] %v411
  %654 = vst [vmem:[%s2 + $0x28] sm:$0xff] %v414
  %655 = vst [vmem:[%s2 + $0x30] sm:$0xff] %v419
  %656 = vst [vmem:[%s2 + $0x38] sm:$0xff] %v422
  %657 = vst [vmem:[%s2 + $0x40] sm:$0xff] %v427
  %658 = vst [vmem:[%s2 + $0x48] sm:$0xff] %v430
  %659 = vst [vmem:[%s2 + $0x50] sm:$0xff] %v435
  %660 = vst [vmem:[%s2 + $0x58] sm:$0xff] %v438
  %661 = vst [vmem:[%s2 + $0x60] sm:$0xff] %v443
  %662 = vst [vmem:[%s2 + $0x68] sm:$0xff] %v446
  %663 = vst [vmem:[%s2 + $0x70] sm:$0xff] %v451
  %664 = vst [vmem:[%s2 + $0x78] sm:$0xff] %v454
  %665 = vst [vmem:[%s2 + $0x80] sm:$0xff] %v459
  %666 = vst [vmem:[%s2 + $0x88] sm:$0xff] %v462
  %667 = vst [vmem:[%s2 + $0x90] sm:$0xff] %v467
  %668 = vst [vmem:[%s2 + $0x98] sm:$0xff] %v470
  %669 = vst [vmem:[%s2 + $0xa0] sm:$0xff] %v475
  %670 = vst [vmem:[%s2 + $0xa8] sm:$0xff] %v478
  %671 = vst [vmem:[%s2 + $0xb0] sm:$0xff] %v483
  %672 = vst [vmem:[%s2 + $0xb8] sm:$0xff] %v486
  %673 = vst [vmem:[%s2 + $0xc0] sm:$0xff] %v491
  %674 = vst [vmem:[%s2 + $0xc8] sm:$0xff] %v494
  %675 = vst [vmem:[%s2 + $0xd0] sm:$0xff] %v499
  %676 = vst [vmem:[%s2 + $0xd8] sm:$0xff] %v502
  %677 = vst [vmem:[%s2 + $0xe0] sm:$0xff] %v507
  %678 = vst [vmem:[%s2 + $0xe8] sm:$0xff] %v510
  %679 = vst [vmem:[%s2 + $0xf0] sm:$0xff] %v515
  %680 = vst [vmem:[%s2 + $0xf8] sm:$0xff] %v518
  %681 = vst [vmem:[%s2 + $0x100] sm:$0xff] %v523
  %682 = vst [vmem:[%s2 + $0x108] sm:$0xff] %v526
  %683 = vst [vmem:[%s2 + $0x110] sm:$0xff] %v531
  %684 = vst [vmem:[%s2 + $0x118] sm:$0xff] %v534
  %685 = vst [vmem:[%s2 + $0x120] sm:$0xff] %v539
  %686 = vst [vmem:[%s2 + $0x128] sm:$0xff] %v542
  %687 = vst [vmem:[%s2 + $0x130] sm:$0xff] %v547
  %688 = vst [vmem:[%s2 + $0x138] sm:$0xff] %v550
  %689 = vst [vmem:[%s2 + $0x140] sm:$0xff] %v555
  %690 = vst [vmem:[%s2 + $0x148] sm:$0xff] %v558
  %691 = vst [vmem:[%s2 + $0x150] sm:$0xff] %v563
  %692 = vst [vmem:[%s2 + $0x158] sm:$0xff] %v566
  %693 = vst [vmem:[%s2 + $0x160] sm:$0xff] %v571
  %694 = vst [vmem:[%s2 + $0x168] sm:$0xff] %v574
  %695 = vst [vmem:[%s2 + $0x170] sm:$0xff] %v579
  %696 = vst [vmem:[%s2 + $0x178] sm:$0xff] %v582
  %697 = vst [vmem:[%s2 + $0x180] sm:$0xff] %v587
  %698 = vst [vmem:[%s2 + $0x188] sm:$0xff] %v590
  %699 = vst [vmem:[%s2 + $0x190] sm:$0xff] %v595
  %700 = vst [vmem:[%s2 + $0x198] sm:$0xff] %v598
  %701 = vst [vmem:[%s2 + $0x1a0] sm:$0xff] %v603
  %702 = vst [vmem:[%s2 + $0x1a8] sm:$0xff] %v606
  %703 = vst [vmem:[%s2 + $0x1b0] sm:$0xff] %v611
  %704 = vst [vmem:[%s2 + $0x1b8] sm:$0xff] %v614
  %705 = vst [vmem:[%s2 + $0x1c0] sm:$0xff] %v619
  %706 = vst [vmem:[%s2 + $0x1c8] sm:$0xff] %v622
  %707 = vst [vmem:[%s2 + $0x1d0] sm:$0xff] %v627
  %708 = vst [vmem:[%s2 + $0x1d8] sm:$0xff] %v630
  %709 = vst [vmem:[%s2 + $0x1e0] sm:$0xff] %v635
  %710 = vst [vmem:[%s2 + $0x1e8] sm:$0xff] %v638
  %711 = vst [vmem:[%s2 + $0x1f0] sm:$0xff] %v643
  %712 = vst [vmem:[%s2 + $0x1f8] sm:$0xff] %v646
  %v713 = vadd.f32 %v395, %v398
  %v714 = vadd.f32 %v713, %v403
  %v715 = vadd.f32 %v714, %v406
  %v716 = vadd.f32 %v715, %v411
  %v717 = vadd.f32 %v716, %v414
  %v718 = vadd.f32 %v717, %v419
  %v719 = vadd.f32 %v718, %v422
  %v720 = vadd.f32 %v719, %v427
  %v721 = vadd.f32 %v720, %v430
  %v722 = vadd.f32 %v721, %v435
  %v723 = vadd.f32 %v722, %v438
  %v724 = vadd.f32 %v723, %v443
  %v725 = vadd.f32 %v724, %v446
  %v726 = vadd.f32 %v725, %v451
  %v727 = vadd.f32 %v726, %v454
  %v728 = vadd.f32 %v727, %v459
  %v729 = vadd.f32 %v728, %v462
  %v730 = vadd.f32 %v729, %v467
  %v731 = vadd.f32 %v730, %v470
  %v732 = vadd.f32 %v731, %v475
  %v733 = vadd.f32 %v732, %v478
  %v734 = vadd.f32 %v733, %v483
  %v735 = vadd.f32 %v734, %v486
  %v736 = vadd.f32 %v735, %v491
  %v737 = vadd.f32 %v736, %v494
  %v738 = vadd.f32 %v737, %v499
  %v739 = vadd.f32 %v738, %v502
  %v740 = vadd.f32 %v739, %v507
  %v741 = vadd.f32 %v740, %v510
  %v742 = vadd.f32 %v741, %v515
  %v743 = vadd.f32 %v742, %v518
  %v744 = vadd.f32 %v743, %v523
  %v745 = vadd.f32 %v744, %v526
  %v746 = vadd.f32 %v745, %v531
  %v747 = vadd.f32 %v746, %v534
  %v748 = vadd.f32 %v747, %v539
  %v749 = vadd.f32 %v748, %v542
  %v750 = vadd.f32 %v749, %v547
  %v751 = vadd.f32 %v750, %v550
  %v752 = vadd.f32 %v751, %v555
  %v753 = vadd.f32 %v752, %v558
  %v754 = vadd.f32 %v753, %v563
  %v755 = vadd.f32 %v754, %v566
  %v756 = vadd.f32 %v755, %v571
  %v757 = vadd.f32 %v756, %v574
  %v758 = vadd.f32 %v757, %v579
  %v759 = vadd.f32 %v758, %v582
  %v760 = vadd.f32 %v759, %v587
  %v761 = vadd.f32 %v760, %v590
  %v762 = vadd.f32 %v761, %v595
  %v763 = vadd.f32 %v762, %v598
  %v764 = vadd.f32 %v763, %v603
  %v765 = vadd.f32 %v764, %v606
  %v766 = vadd.f32 %v765, %v611
  %v767 = vadd.f32 %v766, %v614
  %v768 = vadd.f32 %v767, %v619
  %v769 = vadd.f32 %v768, %v622
  %v770 = vadd.f32 %v769, %v627
  %v771 = vadd.f32 %v770, %v630
  %v772 = vadd.f32 %v771, %v635
  %v773 = vadd.f32 %v772, %v638
  %v774 = vadd.f32 %v773, %v643
  %v775 = vadd.f32 %v774, %v646
  %v776 = vrot.slane %v775, 4
  %v777 = vadd.f32 %v775, %v776
  %v778 = vrot.slane %v777, 2
  %v779 = vadd.f32 %v777, %v778
  %v780 = vrot.slane %v779, 1
  %v781 = vadd.f32 %v779, %v780
  %v782 = vmul.f32 %v395, %v395
  %v783 = vmul.f32 %v398, %v398
  %v784 = vmul.f32 %v403, %v403
  %v785 = vmul.f32 %v406, %v406
  %v786 = vmul.f32 %v411, %v411
  %v787 = vmul.f32 %v414, %v414
  %v788 = vmul.f32 %v419, %v419
  %v789 = vmul.f32 %v422, %v422
  %v790 = vmul.f32 %v427, %v427
  %v791 = vmul.f32 %v430, %v430
  %v792 = vmul.f32 %v435, %v435
  %v793 = vmul.f32 %v438, %v438
  %v794 = vmul.f32 %v443, %v443
  %v795 = vmul.f32 %v446, %v446
  %v796 = vmul.f32 %v451, %v451
  %v797 = vmul.f32 %v454, %v454
  %v798 = vmul.f32 %v459, %v459
  %v799 = vmul.f32 %v462, %v462
  %v800 = vmul.f32 %v467, %v467
  %v801 = vmul.f32 %v470, %v470
  %v802 = vmul.f32 %v475, %v475
  %v803 = vmul.f32 %v478, %v478
  %v804 = vmul.f32 %v483, %v483
  %v805 = vmul.f32 %v486, %v486
  %v806 = vmul.f32 %v491, %v491
  %v807 = vmul.f32 %v494, %v494
  %v808 = vmul.f32 %v499, %v499
  %v809 = vmul.f32 %v502, %v502
  %v810 = vmul.f32 %v507, %v507
  %v811 = vmul.f32 %v510, %v510
  %v812 = vmul.f32 %v515, %v515
  %v813 = vmul.f32 %v518, %v518
  %v814 = vmul.f32 %v523, %v523
  %v815 = vmul.f32 %v526, %v526
  %v816 = vmul.f32 %v531, %v531
  %v817 = vmul.f32 %v534, %v534
  %v818 = vmul.f32 %v539, %v539
  %v819 = vmul.f32 %v542, %v542
  %v820 = vmul.f32 %v547, %v547
  %v821 = vmul.f32 %v550, %v550
  %v822 = vmul.f32 %v555, %v555
  %v823 = vmul.f32 %v558, %v558
  %v824 = vmul.f32 %v563, %v563
  %v825 = vmul.f32 %v566, %v566
  %v826 = vmul.f32 %v571, %v571
  %v827 = vmul.f32 %v574, %v574
  %v828 = vmul.f32 %v579, %v579
  %v829 = vmul.f32 %v582, %v582
  %v830 = vmul.f32 %v587, %v587
  %v831 = vmul.f32 %v590, %v590
  %v832 = vmul.f32 %v595, %v595
  %v833 = vmul.f32 %v598, %v598
  %v834 = vmul.f32 %v603, %v603
  %v835 = vmul.f32 %v606, %v606
  %v836 = vmul.f32 %v611, %v611
  %v837 = vmul.f32 %v614, %v614
  %v838 = vmul.f32 %v619, %v619
  %v839 = vmul.f32 %v622, %v622
  %v840 = vmul.f32 %v627, %v627
  %v841 = vmul.f32 %v630, %v630
  %v842 = vmul.f32 %v635, %v635
  %v843 = vmul.f32 %v638, %v638
  %v844 = vmul.f32 %v643, %v643
  %v845 = vmul.f32 %v646, %v646
  %v846 = vadd.f32 %v782, %v783
  %v847 = vadd.f32 %v846, %v784
  %v848 = vadd.f32 %v847, %v785
  %v849 = vadd.f32 %v848, %v786
  %v850 = vadd.f32 %v849, %v787
  %v851 = vadd.f32 %v850, %v788
  %v852 = vadd.f32 %v851, %v789
  %v853 = vadd.f32 %v852, %v790
  %v854 = vadd.f32 %v853, %v791
  %v855 = vadd.f32 %v854, %v792
  %v856 = vadd.f32 %v855, %v793
  %v857 = vadd.f32 %v856, %v794
  %v858 = vadd.f32 %v857, %v795
  %v859 = vadd.f32 %v858, %v796
  %v860 = vadd.f32 %v859, %v797
  %v861 = vadd.f32 %v860, %v798
  %v862 = vadd.f32 %v861, %v799
  %v863 = vadd.f32 %v862, %v800
  %v864 = vadd.f32 %v863, %v801
  %v865 = vadd.f32 %v864, %v802
  %v866 = vadd.f32 %v865, %v803
  %v867 = vadd.f32 %v866, %v804
  %v868 = vadd.f32 %v867, %v805
  %v869 = vadd.f32 %v868, %v806
  %v870 = vadd.f32 %v869, %v807
  %v871 = vadd.f32 %v870, %v808
  %v872 = vadd.f32 %v871, %v809
  %v873 = vadd.f32 %v872, %v810
  %v874 = vadd.f32 %v873, %v811
  %v875 = vadd.f32 %v874, %v812
  %v876 = vadd.f32 %v875, %v813
  %v877 = vadd.f32 %v876, %v814
  %v878 = vadd.f32 %v877, %v815
  %v879 = vadd.f32 %v878, %v816
  %v880 = vadd.f32 %v879, %v817
  %v881 = vadd.f32 %v880, %v818
  %v882 = vadd.f32 %v881, %v819
  %v883 = vadd.f32 %v882, %v820
  %v884 = vadd.f32 %v883, %v821
  %v885 = vadd.f32 %v884, %v822
  %v886 = vadd.f32 %v885, %v823
  %v887 = vadd.f32 %v886, %v824
  %v888 = vadd.f32 %v887, %v825
  %v889 = vadd.f32 %v888, %v826
  %v890 = vadd.f32 %v889, %v827
  %v891 = vadd.f32 %v890, %v828
  %v892 = vadd.f32 %v891, %v829
  %v893 = vadd.f32 %v892, %v830
  %v894 = vadd.f32 %v893, %v831
  %v895 = vadd.f32 %v894, %v832
  %v896 = vadd.f32 %v895, %v833
  %v897 = vadd.f32 %v896, %v834
  %v898 = vadd.f32 %v897, %v835
  %v899 = vadd.f32 %v898, %v836
  %v900 = vadd.f32 %v899, %v837
  %v901 = vadd.f32 %v900, %v838
  %v902 = vadd.f32 %v901, %v839
  %v903 = vadd.f32 %v902, %v840
  %v904 = vadd.f32 %v903, %v841
  %v905 = vadd.f32 %v904, %v842
  %v906 = vadd.f32 %v905, %v843
  %v907 = vadd.f32 %v906, %v844
  %v908 = vadd.f32 %v907, %v845
  %v909 = vrot.slane %v908, 4
  %v910 = vadd.f32 %v908, %v909
  %v911 = vrot.slane %v910, 2
  %v912 = vadd.f32 %v910, %v911
  %v913 = vrot.slane %v912, 1
  %v914 = vadd.f32 %v912, %v913
  %915 = vst [vmem:[%s3] sm:$0xff] %v781
  %916 = vst [vmem:[%s4] sm:$0xff] %v914
  // Predicated region
  $region10: #{conv_set_forward.2} parent=0 // pred_check
    _
  $region11: #{conv_set_forward.2} parent=0 // pred_check_branch
    %918 = sbr.rel (0) target = $region13
  $region12: #{conv_set_forward.2} parent=0 // pred_region
    _
  $region13: #{conv_set_forward.2} parent=0 // pred_fallthru
    _
  // Predicated region
  $region14: #{conv_set_forward.2} parent=0 // pred_check
    _
  $region15: #{conv_set_forward.2} parent=0 // pred_check_branch
    %920 = sbr.rel (0) target = $region17
  $region16: #{conv_set_forward.2} parent=0 // pred_region
    _
  $region17: #{conv_set_forward.2} parent=0 // pred_fallthru
    _
  // Predicated region
  $region18: #{conv_set_forward.2} parent=0 // pred_check
    _
  $region19: #{conv_set_forward.2} parent=0 // pred_check_branch
    %922 = sbr.rel (0) target = $region21
  $region20: #{conv_set_forward.2} parent=0 // pred_region
    _
  $region21: #{conv_set_forward.2} parent=0 // pred_fallthru
    _
  // Predicated region
  $region22: #{conv_set_forward.2} parent=0 // pred_check
    _
  $region23: #{conv_set_forward.2} parent=0 // pred_check_branch
    %924 = sbr.rel (0) target = $region25
  $region24: #{conv_set_forward.2} parent=0 // pred_region
    _
  $region25: #{conv_set_forward.2} parent=0 // pred_fallthru
    _
  // Predicated region
  $region26: #{conv_set_forward.2} parent=0 // pred_check
    _
  $region27: #{conv_set_forward.2} parent=0 // pred_check_branch
    %926 = sbr.rel (0) target = $region29
  $region28: #{conv_set_forward.2} parent=0 // pred_region
    _
  $region29: #{conv_set_forward.2} parent=0 // pred_fallthru
    _
  // Predicated region
  $region30: #{conv_set_forward.2} parent=0 // pred_check
    _
  $region31: #{conv_set_forward.2} parent=0 // pred_check_branch
    %928 = sbr.rel (0) target = $region33
  $region32: #{conv_set_forward.2} parent=0 // pred_region
    _
  $region33: #{conv_set_forward.2} parent=0 // pred_fallthru
    _

</llo_original>
